<compile_context>
chip_gen: v5e
topology: v5e:2x2
jax: 0.10.0
libtpu: 0.0.40
codegen_flags: <defaults>
</compile_context>

<pallas_src>
import functools

import jax
import jax.numpy as jnp
from jax.experimental import pallas as pl
from jax.experimental.pallas import tpu as pltpu


def _sdpa_kernel(q_ref, k_ref, v_ref, bias_ref, out_ref, attn_ref=None, *,
                 inv_temperature):
    # Each grid point handles one (batch, head-tile, q-tile).
    q = q_ref[0] * inv_temperature   # (TH, TQ, Dk) native dtype; spec: q / temperature
    k = k_ref[0]                     # (TH, Lk, Dk) native dtype
    v = v_ref[0]                     # (TH, Lk, Dv) native dtype
    bias = bias_ref[0, 0]            # (TQ, Lk) f32 additive mask bias (0 or -1e9)

    # scores = (q/temperature) @ k^T; contraction over the shared last dim
    # (MXU-native layout, no explicit transpose of k). Accumulate in f32.
    scores = jnp.einsum("hqd,hkd->hqk", q, k, preferred_element_type=jnp.float32)
    scores = scores + bias[None, :, :]        # masked_fill(mask==0, -1e9) as an add

    # numerically-stable softmax along last dim (f32; v5e VPU/EUP have no bf16)
    scores = scores - jnp.max(scores, axis=-1, keepdims=True)
    e = jnp.exp(scores)
    denom = jnp.sum(e, axis=-1, keepdims=True)
    # exact reciprocal (only (TH,TQ,1) elements) so attn rows sum to 1.
    attn = e * pl.reciprocal(denom)

    # dropout (eval mode) -> identity

    # attn @ v with attn cast to v's dtype so bf16 inputs run the MXU at full rate
    out = jnp.einsum("hqk,hkd->hqd", attn.astype(v.dtype), v,
                     preferred_element_type=jnp.float32)

    if attn_ref is not None:
        attn_ref[0] = attn.astype(attn_ref.dtype)
    out_ref[0] = out.astype(out_ref.dtype)


def _chip_config():
    """(max query-tile rows, scoped-VMEM limit bytes) per TPU generation."""
    kind = ""
    try:
        kind = jax.devices()[0].device_kind.lower()
    except Exception:
        pass
    if "v7" in kind:
        cfg = (256, 48 << 20)    # v7x: 256-row MXU, only 64 MiB physical VMEM
    elif "v6" in kind:
        cfg = (256, 100 << 20)   # v6e: 256-row MXU, 128 MiB VMEM
    elif "v5" in kind:
        cfg = (128, 100 << 20)   # v5e: 128x128 MXU, 128 MiB VMEM
    else:
        cfg = (128, 64 << 20)    # unknown generation: conservative defaults
    # never ask for more scoped VMEM than the chip physically has
    try:
        cap = pltpu.get_tpu_info().vmem_capacity_bytes
        cfg = (cfg[0], min(cfg[1], int(cap * 0.75)))
    except Exception:
        pass
    return cfg


def _pick_head_tile(H, TQ, Lk, Dk, Dv, *, in_itemsize, out_itemsize,
                    return_attn, budget):
    """Largest divisor of H whose estimated per-step VMEM footprint fits budget."""
    def footprint(th):
        kv = th * Lk * (Dk + Dv) * in_itemsize          # K + V, single-buffered
        qin = 2 * th * TQ * Dk * in_itemsize            # q, double-buffered
        bias = 2 * TQ * Lk * 4                          # f32 additive mask bias
        outs = 2 * th * TQ * Dv * out_itemsize          # output, double-buffered
        if return_attn:
            outs += 2 * th * TQ * Lk * out_itemsize     # attn writeback
        tmps = 3 * th * TQ * Lk * 4                     # f32 scores / exp / attn
        return kv + qin + bias + outs + tmps

    th = H
    while th > 1 and footprint(th) > budget:
        th -= 1
        while H % th:
            th -= 1
    return max(th, 1)


def scaled_dot_product_attention(q, k, v, mask, temperature, *, return_attn=True):
    B, H, Lq, Dk = q.shape
    _, _, Lk, Dv = v.shape

    # Precompute the additive mask bias in the wrapper (mask is already being
    # rewritten anyway); the extra DMA is negligible next to the attn writeback.
    if mask is None:
        bias = jnp.zeros((B, 1, Lq, Lk), dtype=jnp.float32)
    else:
        bias = jnp.where(mask == 0, jnp.float32(-1e9), jnp.float32(0.0))
        bias = jnp.broadcast_to(bias, (B, 1, Lq, Lk)).astype(jnp.float32)

    tq_max, vmem_limit = _chip_config()
    TQ = Lq if Lq <= tq_max else tq_max
    TH = _pick_head_tile(
        H, TQ, Lk, Dk, Dv,
        in_itemsize=q.dtype.itemsize, out_itemsize=q.dtype.itemsize,
        return_attn=return_attn, budget=int(vmem_limit * 0.6))

    grid = (B, H // TH, pl.cdiv(Lq, TQ))   # q-tile innermost: K/V stay resident

    kernel = functools.partial(_sdpa_kernel,
                               inv_temperature=1.0 / float(temperature))

    def build(single_buffer_kv):
        kv_mode = {"pipeline_mode": pl.Buffered(1)} if single_buffer_kv else {}
        in_specs = [
            pl.BlockSpec((1, TH, TQ, Dk), lambda b, h, qi: (b, h, qi, 0)),   # q
            pl.BlockSpec((1, TH, Lk, Dk), lambda b, h, qi: (b, h, 0, 0),     # k
                         **kv_mode),
            pl.BlockSpec((1, TH, Lk, Dv), lambda b, h, qi: (b, h, 0, 0),     # v
                         **kv_mode),
            pl.BlockSpec((1, 1, TQ, Lk), lambda b, h, qi: (b, 0, qi, 0)),    # bias
        ]
        out_spec_o = pl.BlockSpec((1, TH, TQ, Dv), lambda b, h, qi: (b, h, qi, 0))
        if return_attn:
            out_shape = (jax.ShapeDtypeStruct((B, H, Lq, Dv), q.dtype),
                         jax.ShapeDtypeStruct((B, H, Lq, Lk), q.dtype))
            out_specs = (out_spec_o,
                         pl.BlockSpec((1, TH, TQ, Lk),
                                      lambda b, h, qi: (b, h, qi, 0)))
        else:
            out_shape = jax.ShapeDtypeStruct((B, H, Lq, Dv), q.dtype)
            out_specs = out_spec_o
        return pl.pallas_call(
            kernel,
            out_shape=out_shape,
            grid=grid,
            in_specs=in_specs,
            out_specs=out_specs,
            compiler_params=pltpu.CompilerParams(
                dimension_semantics=("parallel", "parallel", "arbitrary"),
                vmem_limit_bytes=vmem_limit,
            ),
        )

    try:
        result = build(True)(q, k, v, bias)
        jax.block_until_ready(result)
        return result
    except Exception:
        # Fallback if this runtime rejects single-buffered (Buffered(1)) inputs.
        return build(False)(q, k, v, bias)


def _reference(q, k, v, mask, temperature):
    attn = jnp.einsum("bhqd,bhkd->bhqk", q / temperature, k)
    attn = jnp.where(mask == 0, -1e9, attn)
    attn = jax.nn.softmax(attn, axis=-1)
    out = jnp.einsum("bhqk,bhkd->bhqd", attn, v)
    return out, attn


if __name__ == "__main__":
    B, H, Lq, Lk, Dk, Dv = 2, 2, 8, 8, 32, 32
    temperature = float(Dk) ** 0.5

    key = jax.random.PRNGKey(0)
    kq, kk, kv_, km = jax.random.split(key, 4)
    q = jax.random.normal(kq, (B, H, Lq, Dk), dtype=jnp.float32)
    k = jax.random.normal(kk, (B, H, Lk, Dk), dtype=jnp.float32)
    v = jax.random.normal(kv_, (B, H, Lk, Dv), dtype=jnp.float32)
    # mask: 1 = keep, 0 = masked out (broadcast over heads)
    mask = (jax.random.uniform(km, (B, 1, Lq, Lk)) > 0.2).astype(jnp.int32)
    # ensure at least one valid key per query row to avoid all-masked rows
    mask = mask.at[:, :, :, 0].set(1)

    out, attn = scaled_dot_product_attention(q, k, v, mask, temperature)
    jax.block_until_ready((out, attn))

    out_ref, attn_ref = _reference(q, k, v, mask, temperature)
    assert jnp.allclose(out, out_ref, atol=1e-3, rtol=1e-3), "output mismatch"
    assert jnp.allclose(attn, attn_ref, atol=1e-3, rtol=1e-3), "attn mismatch"

    print("KERNEL_OK")
</pallas_src>

<mosaic_0001>
module attributes {stable_mosaic.version = 11 : i64} {
  func.func @_sdpa_kernel(%arg0: i32, %arg1: i32, %arg2: i32, %arg3: memref<1x2x8x32xf32, #tpu.memory_space<vmem>>, %arg4: memref<1x2x8x32xf32, #tpu.memory_space<vmem>>, %arg5: memref<1x2x8x32xf32, #tpu.memory_space<vmem>>, %arg6: memref<1x1x8x8xf32, #tpu.memory_space<vmem>>, %arg7: memref<1x2x8x32xf32, #tpu.memory_space<vmem>>, %arg8: memref<1x2x8x8xf32, #tpu.memory_space<vmem>>) attributes {dimension_semantics = [#tpu.dimension_semantics<parallel>, #tpu.dimension_semantics<parallel>, #tpu.dimension_semantics<arbitrary>], iteration_bounds = array<i64: 2, 1, 1>, scalar_prefetch = 0 : i64, scratch_operands = 0 : i64, tpu.core_type = #tpu.core_type<tc>, window_params = [{transform_indices = @transform_0, window_bounds = array<i64: 1, 2, 8, 32>}, {pipeline_mode = #tpu.pipeline_mode<synchronous>, transform_indices = @transform_1, window_bounds = array<i64: 1, 2, 8, 32>}, {pipeline_mode = #tpu.pipeline_mode<synchronous>, transform_indices = @transform_2, window_bounds = array<i64: 1, 2, 8, 32>}, {transform_indices = @transform_3, window_bounds = array<i64: 1, 1, 8, 8>}, {transform_indices = @transform_4, window_bounds = array<i64: 1, 2, 8, 32>}, {transform_indices = @transform_5, window_bounds = array<i64: 1, 2, 8, 8>}]} {
    %c0 = arith.constant 0 : index
    %c0_0 = arith.constant 0 : index
    %c0_1 = arith.constant 0 : index
    %c0_2 = arith.constant 0 : index
    %0 = vector.load %arg3[%c0, %c0_0, %c0_1, %c0_2] : memref<1x2x8x32xf32, #tpu.memory_space<vmem>>, vector<1x2x8x32xf32>
    %1 = vector.shape_cast %0 : vector<1x2x8x32xf32> to vector<2x8x32xf32>
    %cst = arith.constant 0.176776692 : f32
    %2 = vector.broadcast %cst : f32 to vector<2x8x32xf32>
    %3 = arith.mulf %1, %2 : vector<2x8x32xf32>
    %c0_3 = arith.constant 0 : index
    %c0_4 = arith.constant 0 : index
    %c0_5 = arith.constant 0 : index
    %c0_6 = arith.constant 0 : index
    %4 = vector.load %arg4[%c0_3, %c0_4, %c0_5, %c0_6] : memref<1x2x8x32xf32, #tpu.memory_space<vmem>>, vector<1x2x8x32xf32>
    %5 = vector.shape_cast %4 : vector<1x2x8x32xf32> to vector<2x8x32xf32>
    %c0_7 = arith.constant 0 : index
    %c0_8 = arith.constant 0 : index
    %c0_9 = arith.constant 0 : index
    %c0_10 = arith.constant 0 : index
    %6 = vector.load %arg5[%c0_7, %c0_8, %c0_9, %c0_10] : memref<1x2x8x32xf32, #tpu.memory_space<vmem>>, vector<1x2x8x32xf32>
    %7 = vector.shape_cast %6 : vector<1x2x8x32xf32> to vector<2x8x32xf32>
    %c0_11 = arith.constant 0 : index
    %c0_12 = arith.constant 0 : index
    %c0_13 = arith.constant 0 : index
    %c0_14 = arith.constant 0 : index
    %8 = vector.load %arg6[%c0_11, %c0_12, %c0_13, %c0_14] : memref<1x1x8x8xf32, #tpu.memory_space<vmem>>, vector<1x1x8x8xf32>
    %9 = vector.shape_cast %8 : vector<1x1x8x8xf32> to vector<8x8xf32>
    "tpu.trace_start"() <{level = 10 : i32, message = "hqd,hkd->hqk"}> : () -> ()
    %cst_15 = arith.constant dense<0.000000e+00> : vector<2x8x8xf32>
    %10 = tpu.matmul %3, %5, %cst_15 {dimension_numbers = #tpu.dot_dimension_numbers<[2], [2], [1], [1], [0, 0, 0, 1, 1, 1], [0], [0]>} : vector<2x8x32xf32>, vector<2x8x32xf32>, vector<2x8x8xf32> -> vector<2x8x8xf32>
    "tpu.trace_stop"() : () -> ()
    %11 = vector.shape_cast %9 : vector<8x8xf32> to vector<1x8x8xf32>
    %12 = vector.broadcast %11 : vector<1x8x8xf32> to vector<2x8x8xf32>
    %13 = arith.addf %10, %12 : vector<2x8x8xf32>
    %cst_16 = arith.constant dense<0xFF800000> : vector<2x8xf32>
    %14 = vector.multi_reduction <maximumf>, %13, %cst_16 [2] : vector<2x8x8xf32> to vector<2x8xf32>
    %15 = vector.shape_cast %14 : vector<2x8xf32> to vector<2x8x1xf32>
    %16 = vector.broadcast %15 : vector<2x8x1xf32> to vector<2x8x8xf32>
    %17 = arith.subf %13, %16 : vector<2x8x8xf32>
    %18 = math.exp %17 : vector<2x8x8xf32>
    %cst_17 = arith.constant dense<0.000000e+00> : vector<2x8xf32>
    %19 = vector.multi_reduction <add>, %18, %cst_17 [2] : vector<2x8x8xf32> to vector<2x8xf32>
    %20 = vector.shape_cast %19 : vector<2x8xf32> to vector<2x8x1xf32>
    %21 = tpu.reciprocal %20 : vector<2x8x1xf32> -> vector<2x8x1xf32>
    %22 = vector.broadcast %21 : vector<2x8x1xf32> to vector<2x8x8xf32>
    %23 = arith.mulf %18, %22 : vector<2x8x8xf32>
    "tpu.trace_start"() <{level = 10 : i32, message = "hqk,hkd->hqd"}> : () -> ()
    %cst_18 = arith.constant dense<0.000000e+00> : vector<2x8x32xf32>
    %24 = tpu.matmul %23, %7, %cst_18 {dimension_numbers = #tpu.dot_dimension_numbers<[2], [1], [1], [2], [0, 0, 0, 1, 1, 2], [0], [0]>} : vector<2x8x8xf32>, vector<2x8x32xf32>, vector<2x8x32xf32> -> vector<2x8x32xf32>
    "tpu.trace_stop"() : () -> ()
    %c0_19 = arith.constant 0 : index
    %c0_20 = arith.constant 0 : index
    %c0_21 = arith.constant 0 : index
    %c0_22 = arith.constant 0 : index
    %25 = vector.load %arg8[%c0_19, %c0_20, %c0_21, %c0_22] : memref<1x2x8x8xf32, #tpu.memory_space<vmem>>, vector<1x2x8x8xf32>
    %26 = vector.shape_cast %25 : vector<1x2x8x8xf32> to vector<2x8x8xf32>
    %27 = vector.shape_cast %23 : vector<2x8x8xf32> to vector<1x2x8x8xf32>
    tpu.vector_store %arg8[%c0_19, %c0_20, %c0_21, %c0_22], %27 {strides = array<i32>} : memref<1x2x8x8xf32, #tpu.memory_space<vmem>>, vector<1x2x8x8xf32>,
    %c0_23 = arith.constant 0 : index
    %c0_24 = arith.constant 0 : index
    %c0_25 = arith.constant 0 : index
    %c0_26 = arith.constant 0 : index
    %28 = vector.load %arg7[%c0_23, %c0_24, %c0_25, %c0_26] : memref<1x2x8x32xf32, #tpu.memory_space<vmem>>, vector<1x2x8x32xf32>
    %29 = vector.shape_cast %28 : vector<1x2x8x32xf32> to vector<2x8x32xf32>
    %30 = vector.shape_cast %24 : vector<2x8x32xf32> to vector<1x2x8x32xf32>
    tpu.vector_store %arg7[%c0_23, %c0_24, %c0_25, %c0_26], %30 {strides = array<i32>} : memref<1x2x8x32xf32, #tpu.memory_space<vmem>>, vector<1x2x8x32xf32>,
    return
  }
  func.func @transform_0(%arg0: i32, %arg1: i32, %arg2: i32) -> (i32, i32, i32, i32) {
    %c0_i32 = arith.constant 0 : i32
    %c0_i32_0 = arith.constant 0 : i32
    return %arg0, %arg1, %arg2, %c0_i32 : i32, i32, i32, i32
  }
  func.func @transform_1(%arg0: i32, %arg1: i32, %arg2: i32) -> (i32, i32, i32, i32) {
    %c0_i32 = arith.constant 0 : i32
    %c0_i32_0 = arith.constant 0 : i32
    %c0_i32_1 = arith.constant 0 : i32
    return %arg0, %arg1, %c0_i32, %c0_i32_0 : i32, i32, i32, i32
  }
  func.func @transform_2(%arg0: i32, %arg1: i32, %arg2: i32) -> (i32, i32, i32, i32) {
    %c0_i32 = arith.constant 0 : i32
    %c0_i32_0 = arith.constant 0 : i32
    %c0_i32_1 = arith.constant 0 : i32
    return %arg0, %arg1, %c0_i32, %c0_i32_0 : i32, i32, i32, i32
  }
  func.func @transform_3(%arg0: i32, %arg1: i32, %arg2: i32) -> (i32, i32, i32, i32) {
    %c0_i32 = arith.constant 0 : i32
    %c0_i32_0 = arith.constant 0 : i32
    %c0_i32_1 = arith.constant 0 : i32
    return %arg0, %c0_i32, %arg2, %c0_i32_0 : i32, i32, i32, i32
  }
  func.func @transform_4(%arg0: i32, %arg1: i32, %arg2: i32) -> (i32, i32, i32, i32) {
    %c0_i32 = arith.constant 0 : i32
    %c0_i32_0 = arith.constant 0 : i32
    return %arg0, %arg1, %arg2, %c0_i32 : i32, i32, i32, i32
  }
  func.func @transform_5(%arg0: i32, %arg1: i32, %arg2: i32) -> (i32, i32, i32, i32) {
    %c0_i32 = arith.constant 0 : i32
    %c0_i32_0 = arith.constant 0 : i32
    return %arg0, %arg1, %arg2, %c0_i32 : i32, i32, i32, i32
  }
}

module attributes {stable_mosaic.version = 11 : i64} {
  func.func @_sdpa_kernel(%arg0: i32, %arg1: i32, %arg2: i32, %arg3: memref<1x2x8x32xf32, #tpu.memory_space<vmem>>, %arg4: memref<1x2x8x32xf32, #tpu.memory_space<vmem>>, %arg5: memref<1x2x8x32xf32, #tpu.memory_space<vmem>>, %arg6: memref<1x1x8x8xf32, #tpu.memory_space<vmem>>, %arg7: memref<1x2x8x32xf32, #tpu.memory_space<vmem>>, %arg8: memref<1x2x8x8xf32, #tpu.memory_space<vmem>>) attributes {dimension_semantics = [#tpu.dimension_semantics<parallel>, #tpu.dimension_semantics<parallel>, #tpu.dimension_semantics<arbitrary>], iteration_bounds = array<i64: 2, 1, 1>, scalar_prefetch = 0 : i64, scratch_operands = 0 : i64, tpu.core_type = #tpu.core_type<tc>, window_params = [{transform_indices = @transform_0, window_bounds = array<i64: 1, 2, 8, 32>}, {transform_indices = @transform_1, window_bounds = array<i64: 1, 2, 8, 32>}, {transform_indices = @transform_2, window_bounds = array<i64: 1, 2, 8, 32>}, {transform_indices = @transform_3, window_bounds = array<i64: 1, 1, 8, 8>}, {transform_indices = @transform_4, window_bounds = array<i64: 1, 2, 8, 32>}, {transform_indices = @transform_5, window_bounds = array<i64: 1, 2, 8, 8>}]} {
    %c0 = arith.constant 0 : index
    %c0_0 = arith.constant 0 : index
    %c0_1 = arith.constant 0 : index
    %c0_2 = arith.constant 0 : index
    %0 = vector.load %arg3[%c0, %c0_0, %c0_1, %c0_2] : memref<1x2x8x32xf32, #tpu.memory_space<vmem>>, vector<1x2x8x32xf32>
    %1 = vector.shape_cast %0 : vector<1x2x8x32xf32> to vector<2x8x32xf32>
    %cst = arith.constant 0.176776692 : f32
    %2 = vector.broadcast %cst : f32 to vector<2x8x32xf32>
    %3 = arith.mulf %1, %2 : vector<2x8x32xf32>
    %c0_3 = arith.constant 0 : index
    %c0_4 = arith.constant 0 : index
    %c0_5 = arith.constant 0 : index
    %c0_6 = arith.constant 0 : index
    %4 = vector.load %arg4[%c0_3, %c0_4, %c0_5, %c0_6] : memref<1x2x8x32xf32, #tpu.memory_space<vmem>>, vector<1x2x8x32xf32>
    %5 = vector.shape_cast %4 : vector<1x2x8x32xf32> to vector<2x8x32xf32>
    %c0_7 = arith.constant 0 : index
    %c0_8 = arith.constant 0 : index
    %c0_9 = arith.constant 0 : index
    %c0_10 = arith.constant 0 : index
    %6 = vector.load %arg5[%c0_7, %c0_8, %c0_9, %c0_10] : memref<1x2x8x32xf32, #tpu.memory_space<vmem>>, vector<1x2x8x32xf32>
    %7 = vector.shape_cast %6 : vector<1x2x8x32xf32> to vector<2x8x32xf32>
    %c0_11 = arith.constant 0 : index
    %c0_12 = arith.constant 0 : index
    %c0_13 = arith.constant 0 : index
    %c0_14 = arith.constant 0 : index
    %8 = vector.load %arg6[%c0_11, %c0_12, %c0_13, %c0_14] : memref<1x1x8x8xf32, #tpu.memory_space<vmem>>, vector<1x1x8x8xf32>
    %9 = vector.shape_cast %8 : vector<1x1x8x8xf32> to vector<8x8xf32>
    "tpu.trace_start"() <{level = 10 : i32, message = "hqd,hkd->hqk"}> : () -> ()
    %cst_15 = arith.constant dense<0.000000e+00> : vector<2x8x8xf32>
    %10 = tpu.matmul %3, %5, %cst_15 {dimension_numbers = #tpu.dot_dimension_numbers<[2], [2], [1], [1], [0, 0, 0, 1, 1, 1], [0], [0]>} : vector<2x8x32xf32>, vector<2x8x32xf32>, vector<2x8x8xf32> -> vector<2x8x8xf32>
    "tpu.trace_stop"() : () -> ()
    %11 = vector.shape_cast %9 : vector<8x8xf32> to vector<1x8x8xf32>
    %12 = vector.broadcast %11 : vector<1x8x8xf32> to vector<2x8x8xf32>
    %13 = arith.addf %10, %12 : vector<2x8x8xf32>
    %cst_16 = arith.constant dense<0xFF800000> : vector<2x8xf32>
    %14 = vector.multi_reduction <maximumf>, %13, %cst_16 [2] : vector<2x8x8xf32> to vector<2x8xf32>
    %15 = vector.shape_cast %14 : vector<2x8xf32> to vector<2x8x1xf32>
    %16 = vector.broadcast %15 : vector<2x8x1xf32> to vector<2x8x8xf32>
    %17 = arith.subf %13, %16 : vector<2x8x8xf32>
    %18 = math.exp %17 : vector<2x8x8xf32>
    %cst_17 = arith.constant dense<0.000000e+00> : vector<2x8xf32>
    %19 = vector.multi_reduction <add>, %18, %cst_17 [2] : vector<2x8x8xf32> to vector<2x8xf32>
    %20 = vector.shape_cast %19 : vector<2x8xf32> to vector<2x8x1xf32>
    %21 = tpu.reciprocal %20 : vector<2x8x1xf32> -> vector<2x8x1xf32>
    %22 = vector.broadcast %21 : vector<2x8x1xf32> to vector<2x8x8xf32>
    %23 = arith.mulf %18, %22 : vector<2x8x8xf32>
    "tpu.trace_start"() <{level = 10 : i32, message = "hqk,hkd->hqd"}> : () -> ()
    %cst_18 = arith.constant dense<0.000000e+00> : vector<2x8x32xf32>
    %24 = tpu.matmul %23, %7, %cst_18 {dimension_numbers = #tpu.dot_dimension_numbers<[2], [1], [1], [2], [0, 0, 0, 1, 1, 2], [0], [0]>} : vector<2x8x8xf32>, vector<2x8x32xf32>, vector<2x8x32xf32> -> vector<2x8x32xf32>
    "tpu.trace_stop"() : () -> ()
    %c0_19 = arith.constant 0 : index
    %c0_20 = arith.constant 0 : index
    %c0_21 = arith.constant 0 : index
    %c0_22 = arith.constant 0 : index
    %25 = vector.load %arg8[%c0_19, %c0_20, %c0_21, %c0_22] : memref<1x2x8x8xf32, #tpu.memory_space<vmem>>, vector<1x2x8x8xf32>
    %26 = vector.shape_cast %25 : vector<1x2x8x8xf32> to vector<2x8x8xf32>
    %27 = vector.shape_cast %23 : vector<2x8x8xf32> to vector<1x2x8x8xf32>
    tpu.vector_store %arg8[%c0_19, %c0_20, %c0_21, %c0_22], %27 {strides = array<i32>} : memref<1x2x8x8xf32, #tpu.memory_space<vmem>>, vector<1x2x8x8xf32>,
    %c0_23 = arith.constant 0 : index
    %c0_24 = arith.constant 0 : index
    %c0_25 = arith.constant 0 : index
    %c0_26 = arith.constant 0 : index
    %28 = vector.load %arg7[%c0_23, %c0_24, %c0_25, %c0_26] : memref<1x2x8x32xf32, #tpu.memory_space<vmem>>, vector<1x2x8x32xf32>
    %29 = vector.shape_cast %28 : vector<1x2x8x32xf32> to vector<2x8x32xf32>
    %30 = vector.shape_cast %24 : vector<2x8x32xf32> to vector<1x2x8x32xf32>
    tpu.vector_store %arg7[%c0_23, %c0_24, %c0_25, %c0_26], %30 {strides = array<i32>} : memref<1x2x8x32xf32, #tpu.memory_space<vmem>>, vector<1x2x8x32xf32>,
    return
  }
  func.func @transform_0(%arg0: i32, %arg1: i32, %arg2: i32) -> (i32, i32, i32, i32) {
    %c0_i32 = arith.constant 0 : i32
    %c0_i32_0 = arith.constant 0 : i32
    return %arg0, %arg1, %arg2, %c0_i32 : i32, i32, i32, i32
  }
  func.func @transform_1(%arg0: i32, %arg1: i32, %arg2: i32) -> (i32, i32, i32, i32) {
    %c0_i32 = arith.constant 0 : i32
    %c0_i32_0 = arith.constant 0 : i32
    %c0_i32_1 = arith.constant 0 : i32
    return %arg0, %arg1, %c0_i32, %c0_i32_0 : i32, i32, i32, i32
  }
  func.func @transform_2(%arg0: i32, %arg1: i32, %arg2: i32) -> (i32, i32, i32, i32) {
    %c0_i32 = arith.constant 0 : i32
    %c0_i32_0 = arith.constant 0 : i32
    %c0_i32_1 = arith.constant 0 : i32
    return %arg0, %arg1, %c0_i32, %c0_i32_0 : i32, i32, i32, i32
  }
  func.func @transform_3(%arg0: i32, %arg1: i32, %arg2: i32) -> (i32, i32, i32, i32) {
    %c0_i32 = arith.constant 0 : i32
    %c0_i32_0 = arith.constant 0 : i32
    %c0_i32_1 = arith.constant 0 : i32
    return %arg0, %c0_i32, %arg2, %c0_i32_0 : i32, i32, i32, i32
  }
  func.func @transform_4(%arg0: i32, %arg1: i32, %arg2: i32) -> (i32, i32, i32, i32) {
    %c0_i32 = arith.constant 0 : i32
    %c0_i32_0 = arith.constant 0 : i32
    return %arg0, %arg1, %arg2, %c0_i32 : i32, i32, i32, i32
  }
  func.func @transform_5(%arg0: i32, %arg1: i32, %arg2: i32) -> (i32, i32, i32, i32) {
    %c0_i32 = arith.constant 0 : i32
    %c0_i32_0 = arith.constant 0 : i32
    return %arg0, %arg1, %arg2, %c0_i32 : i32, i32, i32, i32
  }
}

</mosaic_0001>

<llo_original>
// kernel: tpu_custom_call.1
$region0: #{tpu_custom_call.1}
  #allocation0 [shape = 'u32[]', space=smem, size = 0x4, offset = 0x4, fixed_abs, tag = 'smem constant byte address 0x4 - core index']
  #allocation1 [shape = 'u32[72,128]{1,0:T(1,128)}', space=vmem, size = 0x9000, scoped, tag = 'internal scratch']
  %s0 = inlined_call_operand.hbm [shape: f32[2,2,8,32], index: 0, kind: input, shape index: {}]
  %s1 = inlined_call_operand.hbm [shape: f32[2,2,8,32], index: 1, kind: input, shape index: {}]
  %s2 = inlined_call_operand.hbm [shape: f32[2,2,8,32], index: 2, kind: input, shape index: {}]
  %s3 = inlined_call_operand.hbm [shape: f32[2,1,8,8], index: 3, kind: input, shape index: {}]
  %s4 = inlined_call_operand.hbm [shape: f32[2,2,8,32], index: 4, kind: output, shape index: {0}]
  %s5 = inlined_call_operand.hbm [shape: f32[2,2,8,8], index: 5, kind: output, shape index: {1}]
  %6 = xla_tuple %s4, %s5
  %s7 = sld [smem:[#allocation0]]
  $region73: #{tpu_custom_call.1} parent=0
    _
  %s9 = ssub.s32 1, %s7
  %s10 = scalar_select 0, %s9, %s7
  $region1: #{tpu_custom_call.1} parent=0
    #allocation2 [shape = 'u8[16384]{0}', space=vmem, size = 0x4000, scoped, tag = 'input window, operand 0']
    #allocation3 [shape = 's32[2]{0}', space=sflag, size = 0x8, scoped, tag = 'scoped memory for tpu_custom_call.1']
    #allocation4 [shape = 's32[2]{0}', space=sflag, size = 0x8, scoped, tag = 'scoped memory for tpu_custom_call.1']
    #allocation5 [shape = 'u8[8192]{0}', space=vmem, size = 0x2000, scoped, tag = 'input window, operand 1, single buffered']
    #allocation6 [shape = 's32[1]{0}', space=sflag, size = 0x4, scoped, tag = 'scoped memory for tpu_custom_call.1']
    #allocation7 [shape = 'u8[8192]{0}', space=vmem, size = 0x2000, scoped, tag = 'input window, operand 2, single buffered']
    #allocation8 [shape = 'u8[8192]{0}', space=vmem, size = 0x2000, scoped, tag = 'input window, operand 3']
    #allocation9 [shape = 's32[2]{0}', space=sflag, size = 0x8, scoped, tag = 'scoped memory for tpu_custom_call.1']
    #allocation10 [shape = 'u8[16384]{0}', space=vmem, size = 0x4000, scoped, tag = 'output window, operand 0']
    #allocation11 [shape = 'u8[16384]{0}', space=vmem, size = 0x4000, scoped, tag = 'output window, operand 1']
    #allocation12 [shape = 's32[2]{0}', space=sflag, size = 0x8, scoped, tag = 'scoped memory for tpu_custom_call.1']
    %11 = vsyncpa [#allocation3], 0
    %s12 = scalar_lea.sflag [#allocation3], 1
    %13 = vsyncpa %s12, 0
    %14 = vsyncpa [#allocation6], 0
    %15 = vsyncpa [#allocation9], 0
    %s16 = scalar_lea.sflag [#allocation9], 1
    %17 = vsyncpa %s16, 0
    %18 = vsyncpa [#allocation4], 0
    %s19 = scalar_lea.sflag [#allocation4], 1
    %20 = vsyncpa %s19, 0
    %21 = vsyncpa [#allocation12], 0
    %s22 = scalar_lea.sflag [#allocation12], 1
    %23 = vsyncpa %s22, 0
    loop: start=0, step=1, limit=4
    $region2: #{tpu_custom_call.1} parent=1 // loop_pre_header
      _
    $region3: #{tpu_custom_call.1} parent=1 // loop_header
      %s25 = sphi 0, %s29
      %p26 = scmp.ge.s32.totalorder %s25, 4
      %s32 = sphi 0, %s51
      %s33 = sphi 0, %s47
      %s34 = sphi 0, %s43
      %s35 = sphi 0, %s32
      %s36 = sphi 0, %s33
      %s37 = sphi 0, %s34
      %s38 = sphi 0, %s35
      %s39 = sphi 0, %s36
      %s40 = sphi 0, %s37
      %s58 = sphi 0, %s60
      %s61 = sphi 0, %s58
      %s62 = sphi 0, %s61
      %s78 = sphi 0, %s62
      %s86 = sphi 0, %s88
      %s89 = sphi 0, %s86
      %s90 = sphi 0, %s89
      %s106 = sphi 0, %s90
      %s114 = sphi 0, %s116
      %s117 = sphi 0, %s114
      %s118 = sphi 0, %s117
      %s134 = sphi 0, %s118
      %s142 = sphi 0, %s144
      %s145 = sphi 0, %s142
      %s146 = sphi 0, %s145
      %s162 = sphi 0, %s146
      %s172 = sphi 0, %s174
      %s175 = sphi 0, %s172
      %s176 = sphi 0, %s175
      %s192 = sphi 0, %s176
      %s202 = sphi 0, %s204
      %s205 = sphi 0, %s202
      %s206 = sphi 0, %s205
      %s222 = sphi 0, %s206
    $region4: #{tpu_custom_call.1} parent=1 // loop_header_branch
      %28 = sbr.rel (%p26) target = $region8
    $region5: #{tpu_custom_call.1} parent=1 // loop_body
      %s30 = ssub.s32 %s25, 1
      %s31 = ssub.s32 %s25, 2
      %s41 = sadd.s32 1, %s34
      %p42 = scmp.ge.s32.totalorder %s41, 1
      %s43 = scalar_select %p42, 0, %s41
      %s44 = sadd.s32 1, %s33
      %s45 = scalar_select %p42, %s44, %s33
      %p46 = scmp.ge.s32.totalorder %s45, 1
      %s47 = scalar_select %p46, 0, %s45
      %s48 = sadd.s32 1, %s32
      %s49 = scalar_select %p46, %s48, %s32
      %p50 = scmp.ge.s32.totalorder %s49, 2
      %s51 = scalar_select %p50, 0, %s49
      %s52 = ssub.s32 %s32, %s51
      %s53 = ssub.s32 %s33, %s47
      %s54 = sor.u32 %s52, %s53
      %s55 = ssub.s32 %s34, %s43
      %s56 = sor.u32 %s54, %s55
      %p57 = scmp.eq.s32.totalorder %s56, 0
      %s59 = sadd.s32 %s58, 1
      %s60 = scalar_select %p57, %s58, %s59
      %p63 = pneg %p57
      %p64 = scmp.eq.s32.totalorder %s25, 1
      %p65 = por %p63, %p64
      %p66 = scmp.ne.s32.totalorder %s58, %s61
      %p67 = scmp.eq.s32.totalorder %s25, 0
      %p68 = por %p66, %p67
      %p69 = scmp.ne.s32.totalorder %s58, %s61
      %p70 = scmp.eq.s32.totalorder %s30, 1
      %p71 = por %p69, %p70
      %p72 = scmp.ne.s32.totalorder %s61, %s62
      %p73 = scmp.eq.s32.totalorder %s30, 0
      %p74 = por %p72, %p73
      %p75 = scmp.ne.s32.totalorder %s61, %s62
      %p76 = scmp.eq.s32.totalorder %s31, 1
      %p77 = por %p75, %p76
      %p79 = scmp.ne.s32.totalorder %s62, %s78
      %p80 = scmp.eq.s32.totalorder %s31, 0
      %p81 = por %p79, %p80
      %s82 = ssub.s32 %s32, %s51
      %s83 = ssub.s32 %s33, %s47
      %s84 = sor.u32 %s82, %s83
      %p85 = scmp.eq.s32.totalorder %s84, 0
      %s87 = sadd.s32 %s86, 1
      %s88 = scalar_select %p85, %s86, %s87
      %p91 = pneg %p85
      %p92 = scmp.eq.s32.totalorder %s25, 1
      %p93 = por %p91, %p92
      %p94 = scmp.ne.s32.totalorder %s86, %s89
      %p95 = scmp.eq.s32.totalorder %s25, 0
      %p96 = por %p94, %p95
      %p97 = scmp.ne.s32.totalorder %s86, %s89
      %p98 = scmp.eq.s32.totalorder %s30, 1
      %p99 = por %p97, %p98
      %p100 = scmp.ne.s32.totalorder %s89, %s90
      %p101 = scmp.eq.s32.totalorder %s30, 0
      %p102 = por %p100, %p101
      %p103 = scmp.ne.s32.totalorder %s89, %s90
      %p104 = scmp.eq.s32.totalorder %s31, 1
      %p105 = por %p103, %p104
      %p107 = scmp.ne.s32.totalorder %s90, %s106
      %p108 = scmp.eq.s32.totalorder %s31, 0
      %p109 = por %p107, %p108
      %s110 = ssub.s32 %s32, %s51
      %s111 = ssub.s32 %s33, %s47
      %s112 = sor.u32 %s110, %s111
      %p113 = scmp.eq.s32.totalorder %s112, 0
      %s115 = sadd.s32 %s114, 1
      %s116 = scalar_select %p113, %s114, %s115
      %p119 = pneg %p113
      %p120 = scmp.eq.s32.totalorder %s25, 1
      %p121 = por %p119, %p120
      %p122 = scmp.ne.s32.totalorder %s114, %s117
      %p123 = scmp.eq.s32.totalorder %s25, 0
      %p124 = por %p122, %p123
      %p125 = scmp.ne.s32.totalorder %s114, %s117
      %p126 = scmp.eq.s32.totalorder %s30, 1
      %p127 = por %p125, %p126
      %p128 = scmp.ne.s32.totalorder %s117, %s118
      %p129 = scmp.eq.s32.totalorder %s30, 0
      %p130 = por %p128, %p129
      %p131 = scmp.ne.s32.totalorder %s117, %s118
      %p132 = scmp.eq.s32.totalorder %s31, 1
      %p133 = por %p131, %p132
      %p135 = scmp.ne.s32.totalorder %s118, %s134
      %p136 = scmp.eq.s32.totalorder %s31, 0
      %p137 = por %p135, %p136
      %s138 = ssub.s32 %s32, %s51
      %s139 = ssub.s32 %s34, %s43
      %s140 = sor.u32 %s138, %s139
      %p141 = scmp.eq.s32.totalorder %s140, 0
      %s143 = sadd.s32 %s142, 1
      %s144 = scalar_select %p141, %s142, %s143
      %p147 = pneg %p141
      %p148 = scmp.eq.s32.totalorder %s25, 1
      %p149 = por %p147, %p148
      %p150 = scmp.ne.s32.totalorder %s142, %s145
      %p151 = scmp.eq.s32.totalorder %s25, 0
      %p152 = por %p150, %p151
      %p153 = scmp.ne.s32.totalorder %s142, %s145
      %p154 = scmp.eq.s32.totalorder %s30, 1
      %p155 = por %p153, %p154
      %p156 = scmp.ne.s32.totalorder %s145, %s146
      %p157 = scmp.eq.s32.totalorder %s30, 0
      %p158 = por %p156, %p157
      %p159 = scmp.ne.s32.totalorder %s145, %s146
      %p160 = scmp.eq.s32.totalorder %s31, 1
      %p161 = por %p159, %p160
      %p163 = scmp.ne.s32.totalorder %s146, %s162
      %p164 = scmp.eq.s32.totalorder %s31, 0
      %p165 = por %p163, %p164
      %s166 = ssub.s32 %s32, %s51
      %s167 = ssub.s32 %s33, %s47
      %s168 = sor.u32 %s166, %s167
      %s169 = ssub.s32 %s34, %s43
      %s170 = sor.u32 %s168, %s169
      %p171 = scmp.eq.s32.totalorder %s170, 0
      %s173 = sadd.s32 %s172, 1
      %s174 = scalar_select %p171, %s172, %s173
      %p177 = pneg %p171
      %p178 = scmp.eq.s32.totalorder %s25, 1
      %p179 = por %p177, %p178
      %p180 = scmp.ne.s32.totalorder %s172, %s175
      %p181 = scmp.eq.s32.totalorder %s25, 0
      %p182 = por %p180, %p181
      %p183 = scmp.ne.s32.totalorder %s172, %s175
      %p184 = scmp.eq.s32.totalorder %s30, 1
      %p185 = por %p183, %p184
      %p186 = scmp.ne.s32.totalorder %s175, %s176
      %p187 = scmp.eq.s32.totalorder %s30, 0
      %p188 = por %p186, %p187
      %p189 = scmp.ne.s32.totalorder %s175, %s176
      %p190 = scmp.eq.s32.totalorder %s31, 1
      %p191 = por %p189, %p190
      %p193 = scmp.ne.s32.totalorder %s176, %s192
      %p194 = scmp.eq.s32.totalorder %s31, 0
      %p195 = por %p193, %p194
      %s196 = ssub.s32 %s32, %s51
      %s197 = ssub.s32 %s33, %s47
      %s198 = sor.u32 %s196, %s197
      %s199 = ssub.s32 %s34, %s43
      %s200 = sor.u32 %s198, %s199
      %p201 = scmp.eq.s32.totalorder %s200, 0
      %s203 = sadd.s32 %s202, 1
      %s204 = scalar_select %p201, %s202, %s203
      %p207 = pneg %p201
      %p208 = scmp.eq.s32.totalorder %s25, 1
      %p209 = por %p207, %p208
      %p210 = scmp.ne.s32.totalorder %s202, %s205
      %p211 = scmp.eq.s32.totalorder %s25, 0
      %p212 = por %p210, %p211
      %p213 = scmp.ne.s32.totalorder %s202, %s205
      %p214 = scmp.eq.s32.totalorder %s30, 1
      %p215 = por %p213, %p214
      %p216 = scmp.ne.s32.totalorder %s205, %s206
      %p217 = scmp.eq.s32.totalorder %s30, 0
      %p218 = por %p216, %p217
      %p219 = scmp.ne.s32.totalorder %s205, %s206
      %p220 = scmp.eq.s32.totalorder %s31, 1
      %p221 = por %p219, %p220
      %p223 = scmp.ne.s32.totalorder %s206, %s222
      %p224 = scmp.eq.s32.totalorder %s31, 0
      %p225 = por %p223, %p224
      %p226 = scmp.le.s32.totalorder 1, %s25
      %p227 = scmp.lt.s32.totalorder %s25, 3
      %p228 = pnand %p226, %p227
      %p229 = pneg %p228
      // Predicated region
      $region9: #{tpu_custom_call.1} parent=5 // pred_check
        _
      $region10: #{tpu_custom_call.1} parent=5 // pred_check_branch
        %231 = sbr.rel (%p228) target = $region12
      $region11: #{tpu_custom_call.1} parent=5 // pred_region
        %s232 = ssub.s32 %s25, 1
        // Predicated region
        $region13: #{tpu_custom_call.1} parent=11 // pred_check
          %p233 = pneg %p102
        $region14: #{tpu_custom_call.1} parent=11 // pred_check_branch
          %235 = sbr.rel (%p233) target = $region16
        $region15: #{tpu_custom_call.1} parent=11 // pred_region
          %s236 = smul.u32 2, %s36
          %238 = vsyncadd [#allocation6], 0
          %s239 = smul.addr %s35, 2
          %s240 = sadd.s32 %s236, %s239
          %s241 = smul.addr %s240, 8
          %s242 = scalar_lea.hbm %s1, %s241
          %s243 = sshll.u32 %s242, 4
          %s244 = int_to_ptr.hbm [resolvable:$true] %s243
          %s245 = sshll.u32 [#allocation5], 4
          %s246 = int_to_ptr.vmem [resolvable:$true] %s245
          %251 = dma.hbm_to_vmem [thread:$0]  %s244, 256, %s246, [#allocation6], 128, 128, 8
        $region16: #{tpu_custom_call.1} parent=11 // pred_fallthru
          _
        // Predicated region
        $region17: #{tpu_custom_call.1} parent=11 // pred_check
          %p252 = pneg %p130
        $region18: #{tpu_custom_call.1} parent=11 // pred_check_branch
          %254 = sbr.rel (%p252) target = $region20
        $region19: #{tpu_custom_call.1} parent=11 // pred_region
          %s255 = smul.u32 2, %s36
          %257 = vsyncadd [#allocation6], 0
          %s258 = smul.addr %s35, 2
          %s259 = sadd.s32 %s255, %s258
          %s260 = smul.addr %s259, 8
          %s261 = scalar_lea.hbm %s2, %s260
          %s262 = sshll.u32 %s261, 4
          %s263 = int_to_ptr.hbm [resolvable:$true] %s262
          %s264 = sshll.u32 [#allocation7], 4
          %s265 = int_to_ptr.vmem [resolvable:$true] %s264
          %270 = dma.hbm_to_vmem [thread:$0]  %s263, 256, %s265, [#allocation6], 128, 128, 8
        $region20: #{tpu_custom_call.1} parent=11 // pred_fallthru
          _
      $region12: #{tpu_custom_call.1} parent=5 // pred_fallthru
        _
      %p271 = scmp.lt.s32.totalorder %s25, 2
      // Predicated region
      $region21: #{tpu_custom_call.1} parent=5 // pred_check
        %p272 = pneg %p271
      $region22: #{tpu_custom_call.1} parent=5 // pred_check_branch
        %274 = sbr.rel (%p272) target = $region24
      $region23: #{tpu_custom_call.1} parent=5 // pred_region
        // Predicated region
        $region25: #{tpu_custom_call.1} parent=23 // pred_check
          %p275 = pneg %p68
        $region26: #{tpu_custom_call.1} parent=23 // pred_check_branch
          %277 = sbr.rel (%p275) target = $region28
        $region27: #{tpu_custom_call.1} parent=23 // pred_region
          %s278 = sand.u32 %s58, 1
          %s279 = scalar_lea.sflag [#allocation3], %s278
          %s280 = sand.u32 %s58, 1
          %s281 = smul.addr %s280, 16
          %s282 = scalar_lea.vmem [#allocation2], %s281
          %s283 = smul.u32 2, %s33
          %285 = vsyncadd %s279, 0
          %s286 = sadd.s32 %s34, %s283
          %s287 = smul.addr %s32, 2
          %s288 = sadd.s32 %s286, %s287
          %s289 = smul.addr %s288, 8
          %s290 = scalar_lea.hbm %s0, %s289
          %s291 = sshll.u32 %s290, 4
          %s292 = int_to_ptr.hbm [resolvable:$true] %s291
          %s293 = sshll.u32 %s282, 4
          %s294 = int_to_ptr.vmem [resolvable:$true] %s293
          %299 = dma.hbm_to_vmem [thread:$0]  %s292, 256, %s294, %s279, 128, 128, 8
        $region28: #{tpu_custom_call.1} parent=23 // pred_fallthru
          _
        // Predicated region
        $region29: #{tpu_custom_call.1} parent=23 // pred_check
          %p300 = pneg %p152
        $region30: #{tpu_custom_call.1} parent=23 // pred_check_branch
          %302 = sbr.rel (%p300) target = $region32
        $region31: #{tpu_custom_call.1} parent=23 // pred_region
          %s303 = sand.u32 %s142, 1
          %s304 = scalar_lea.sflag [#allocation9], %s303
          %s305 = sand.u32 %s142, 1
          %s306 = smul.addr %s305, 8
          %s307 = scalar_lea.vmem [#allocation8], %s306
          %309 = vsyncadd %s304, 0
          %s310 = sadd.s32 %s34, %s32
          %s311 = smul.addr %s310, 8
          %s312 = scalar_lea.hbm %s3, %s311
          %s314 = sshll.u32 %s312, 4
          %s315 = int_to_ptr.hbm [resolvable:$true] %s314
          %s316 = sshll.u32 %s307, 4
          %s317 = int_to_ptr.vmem [resolvable:$true] %s316
          %319 = dma.hbm_to_vmem [thread:$0]  %s315, 128, %s317, %s304
        $region32: #{tpu_custom_call.1} parent=23 // pred_fallthru
          _
      $region24: #{tpu_custom_call.1} parent=5 // pred_fallthru
        _
      %p320 = scmp.le.s32.totalorder 1, %s25
      %p321 = scmp.lt.s32.totalorder %s25, 3
      %p322 = pnand %p320, %p321
      %p323 = pneg %p322
      // Predicated region
      $region33: #{tpu_custom_call.1} parent=5 // pred_check
        _
      $region34: #{tpu_custom_call.1} parent=5 // pred_check_branch
        %325 = sbr.rel (%p322) target = $region36
      $region35: #{tpu_custom_call.1} parent=5 // pred_region
        %s326 = ssub.s32 %s25, 1
        %s327 = sand.u32 %s61, 1
        %s328 = scalar_lea.sflag [#allocation3], %s327
        %s329 = sand.u32 %s61, 1
        %s330 = smul.addr %s329, 16
        %s331 = scalar_lea.vmem [#allocation2], %s330
        // Predicated region
        $region37: #{tpu_custom_call.1} parent=35 // pred_check
          %p332 = pneg %p74
        $region38: #{tpu_custom_call.1} parent=35 // pred_check_branch
          %334 = sbr.rel (%p332) target = $region40
        $region39: #{tpu_custom_call.1} parent=35 // pred_region
          %336 = dma.done %s328, 256
        $region40: #{tpu_custom_call.1} parent=35 // pred_fallthru
          _
        // Predicated region
        $region41: #{tpu_custom_call.1} parent=35 // pred_check
          %p337 = pneg %p102
        $region42: #{tpu_custom_call.1} parent=35 // pred_check_branch
          %339 = sbr.rel (%p337) target = $region44
        $region43: #{tpu_custom_call.1} parent=35 // pred_region
          %341 = dma.done [#allocation6], 256
        $region44: #{tpu_custom_call.1} parent=35 // pred_fallthru
          _
        // Predicated region
        $region45: #{tpu_custom_call.1} parent=35 // pred_check
          %p342 = pneg %p130
        $region46: #{tpu_custom_call.1} parent=35 // pred_check_branch
          %344 = sbr.rel (%p342) target = $region48
        $region47: #{tpu_custom_call.1} parent=35 // pred_region
          %346 = dma.done [#allocation6], 256
        $region48: #{tpu_custom_call.1} parent=35 // pred_fallthru
          _
        %s347 = sand.u32 %s145, 1
        %s348 = scalar_lea.sflag [#allocation9], %s347
        %s349 = sand.u32 %s145, 1
        %s350 = smul.addr %s349, 8
        %s351 = scalar_lea.vmem [#allocation8], %s350
        // Predicated region
        $region49: #{tpu_custom_call.1} parent=35 // pred_check
          %p352 = pneg %p158
        $region50: #{tpu_custom_call.1} parent=35 // pred_check_branch
          %354 = sbr.rel (%p352) target = $region52
        $region51: #{tpu_custom_call.1} parent=35 // pred_region
          %356 = dma.done %s348, 128
        $region52: #{tpu_custom_call.1} parent=35 // pred_fallthru
          _
        %s357 = sand.u32 %s61, 1
        %s358 = scalar_lea.sflag [#allocation3], %s357
        %s359 = sand.u32 %s61, 1
        %s360 = smul.addr %s359, 16
        %s361 = scalar_lea.vmem [#allocation2], %s360
        %p362 = pneg %p74
        %p363 = pneg %p71
        %p364 = pneg %p102
        %p365 = pneg %p99
        %p366 = pneg %p130
        %p367 = pneg %p127
        %s368 = sand.u32 %s145, 1
        %s369 = scalar_lea.sflag [#allocation9], %s368
        %s370 = sand.u32 %s145, 1
        %s371 = smul.addr %s370, 8
        %s372 = scalar_lea.vmem [#allocation8], %s371
        %p373 = pneg %p158
        %p374 = pneg %p155
        %p375 = pneg %p188
        %p376 = pneg %p185
        %s377 = sand.u32 %s175, 1
        %s378 = scalar_lea.sflag [#allocation4], %s377
        %s379 = sand.u32 %s175, 1
        %s380 = smul.addr %s379, 16
        %s381 = scalar_lea.vmem [#allocation10], %s380
        %p382 = pneg %p218
        %p383 = pneg %p215
        %s384 = sand.u32 %s205, 1
        %s385 = scalar_lea.sflag [#allocation12], %s384
        %s386 = sand.u32 %s205, 1
        %s387 = smul.addr %s386, 16
        %s388 = scalar_lea.vmem [#allocation11], %s387
        %s389 = smul.u32 2, %s36
        %s390 = smul.u32 2, %s36
        %s391 = smul.u32 2, %s36
        %s392 = smul.u32 2, %s36
        %s393 = smul.u32 2, %s36
        %v394 = vld [vmem:[%s331] sm:$0xff]
        %v395 = vld [vmem:[%s331 + $0x8] sm:$0xff]
        %v396 = vmul.f32 %v394, 0.17677669
        %v397 = vmul.f32 %v395, 0.17677669
        %v398 = vld [vmem:[#allocation5] sm:$0xff]
        %v399 = vld [vmem:[#allocation5 + $0x8] sm:$0xff]
        %v400 = vld [vmem:[#allocation7] sm:$0xff]
        %v401 = vld [vmem:[#allocation7 + $0x8] sm:$0xff]
        %v402 = vld [vmem:[%s351] sm:$0xff]
        %vm403 = vcmask 261120
        %v405 = vsel %vm403, %v396, 0
        %v408 = vsel %vm403, %v398, 0
        %410 = vmatpush.xpose.msra.mxu0 0.0
        %411 = vmatpush.xpose.msra.mxu0 0.0
        %412 = vmatpush.xpose.msra.mxu0 0.0
        %413 = vmatpush.xpose.msra.mxu0 0.0
        %414 = vmatpush.xpose.msra.mxu0 0.0
        %415 = vmatpush.xpose.msra.mxu0 0.0
        %416 = vmatpush.xpose.msra.mxu0 0.0
        %417 = vmatpush.xpose.msra.mxu0 0.0
        %418 = vmatpush.xpose.msra.mxu0 0.0
        %419 = vmatpush.xpose.msra.mxu0 0.0
        %420 = vmatpush.xpose.msra.mxu0 0.0
        %421 = vmatpush.xpose.msra.mxu0 0.0
        %422 = vmatpush.xpose.msra.mxu0 0.0
        %423 = vmatpush.xpose.msra.mxu0 0.0
        %424 = vmatpush.xpose.msra.mxu0 0.0
        %425 = vmatpush.xpose.msra.mxu0 %v408
        %426 = vmatmul.f32.gmra.mxu0 %v405
        %v427 = vpop.f32.mrf.mxu0
        %v428 = vadd.f32 %v402, %v427
        %429 = vdwg.mxu0
        %v431 = vsel %vm403, %v397, 0
        %v434 = vsel %vm403, %v399, 0
        %436 = vmatpush.xpose.msra.mxu0 0.0
        %437 = vmatpush.xpose.msra.mxu0 0.0
        %438 = vmatpush.xpose.msra.mxu0 0.0
        %439 = vmatpush.xpose.msra.mxu0 0.0
        %440 = vmatpush.xpose.msra.mxu0 0.0
        %441 = vmatpush.xpose.msra.mxu0 0.0
        %442 = vmatpush.xpose.msra.mxu0 0.0
        %443 = vmatpush.xpose.msra.mxu0 0.0
        %444 = vmatpush.xpose.msra.mxu0 0.0
        %445 = vmatpush.xpose.msra.mxu0 0.0
        %446 = vmatpush.xpose.msra.mxu0 0.0
        %447 = vmatpush.xpose.msra.mxu0 0.0
        %448 = vmatpush.xpose.msra.mxu0 0.0
        %449 = vmatpush.xpose.msra.mxu0 0.0
        %450 = vmatpush.xpose.msra.mxu0 0.0
        %451 = vmatpush.xpose.msra.mxu0 %v434
        %452 = vmatmul.f32.gmra.mxu0 %v431
        %v453 = vpop.f32.mrf.mxu0
        %v454 = vadd.f32 %v402, %v453
        %455 = vdwg.mxu0
        %vm456 = vcmask 64512
        %v457 = vsel %vm456, %v428, -inf
        %458 = vmax.xlane.f32.xlu0 %v457
        %v459 = vpop.xlane.xlu0 %458
        %v460 = vsel %vm456, %v454, -inf
        %461 = vmax.xlane.f32.xlu0 %v460
        %v462 = vpop.xlane.xlu0 %461
        %v463 = vsub.f32 %v428, %v459
        %v464 = vsub.f32 %v454, %v462
        %v465 = vmul.f32 %v463, 1.442695
        %v466 = vpow.pop %v465
        %v467 = vmul.f32 %v464, 1.442695
        %v468 = vpow.pop %v467
        %v469 = vsel %vm456, %v466, 0.0
        %470 = vadd.xlane.f32.xlu0 %v469
        %v471 = vpop.xlane.xlu0 %470
        %v472 = vsel %vm456, %v468, 0.0
        %473 = vadd.xlane.f32.xlu0 %v472
        %v474 = vpop.xlane.xlu0 %473
        %v475 = vrcp.pop %v471
        %v476 = vmul.f32 %v471, %v475
        %v477 = vsub.f32 1.0, %v476
        %v478 = vmul.f32 %v475, %v477
        %v479 = vadd.f32 %v475, %v478
        %vm480 = vweird.f32 %v471
        %vm481 = vweird.f32 %v475
        %vm482 = vmor %vm480, %vm481
        %v483 = vsel %vm482, %v475, %v479
        %v484 = vand.u32 2147483647, %v471
        %vm485 = vcmp.eq.f32.partialorder %v484, 8.507059e+37
        %v486 = vand.u32 %v471, 2147483648
        %v487 = vor.u32 1.1754944e-38, %v486
        %v488 = vsel %vm485, %v487, %v483
        %v489 = vrcp.pop %v474
        %v490 = vmul.f32 %v474, %v489
        %v491 = vsub.f32 1.0, %v490
        %v492 = vmul.f32 %v489, %v491
        %v493 = vadd.f32 %v489, %v492
        %vm494 = vweird.f32 %v474
        %vm495 = vweird.f32 %v489
        %vm496 = vmor %vm494, %vm495
        %v497 = vsel %vm496, %v489, %v493
        %v498 = vand.u32 2147483647, %v474
        %vm499 = vcmp.eq.f32.partialorder %v498, 8.507059e+37
        %v500 = vand.u32 %v474, 2147483648
        %v501 = vor.u32 1.1754944e-38, %v500
        %v502 = vsel %vm499, %v501, %v497
        %v503 = vmul.f32 %v466, %v488
        %v504 = vmul.f32 %v468, %v502
        %v506 = vsel %vm456, %v503, 0
        %508 = vmatpush.msra.mxu0 0.0
        %509 = vmatpush.msra.mxu0 0.0
        %510 = vmatpush.msra.mxu0 0.0
        %511 = vmatpush.msra.mxu0 0.0
        %512 = vmatpush.msra.mxu0 0.0
        %513 = vmatpush.msra.mxu0 0.0
        %514 = vmatpush.msra.mxu0 0.0
        %515 = vmatpush.msra.mxu0 0.0
        %516 = vmatpush.msra.mxu0 0.0
        %517 = vmatpush.msra.mxu0 0.0
        %518 = vmatpush.msra.mxu0 0.0
        %519 = vmatpush.msra.mxu0 0.0
        %520 = vmatpush.msra.mxu0 0.0
        %521 = vmatpush.msra.mxu0 0.0
        %522 = vmatpush.msra.mxu0 0.0
        %523 = vmatpush.msra.mxu0 %v400
        %524 = vmatmul.f32.gmra.mxu0 %v506
        %v525 = vpop.f32.mrf.mxu0
        %v526 = vadd.f32 0.0, %v525
        %527 = vdwg.mxu0
        %v529 = vsel %vm456, %v504, 0
        %531 = vmatpush.msra.mxu0 0.0
        %532 = vmatpush.msra.mxu0 0.0
        %533 = vmatpush.msra.mxu0 0.0
        %534 = vmatpush.msra.mxu0 0.0
        %535 = vmatpush.msra.mxu0 0.0
        %536 = vmatpush.msra.mxu0 0.0
        %537 = vmatpush.msra.mxu0 0.0
        %538 = vmatpush.msra.mxu0 0.0
        %539 = vmatpush.msra.mxu0 0.0
        %540 = vmatpush.msra.mxu0 0.0
        %541 = vmatpush.msra.mxu0 0.0
        %542 = vmatpush.msra.mxu0 0.0
        %543 = vmatpush.msra.mxu0 0.0
        %544 = vmatpush.msra.mxu0 0.0
        %545 = vmatpush.msra.mxu0 0.0
        %546 = vmatpush.msra.mxu0 %v401
        %547 = vmatmul.f32.gmra.mxu0 %v529
        %v548 = vpop.f32.mrf.mxu0
        %v549 = vadd.f32 0.0, %v548
        %550 = vdwg.mxu0
        %551 = vst.msk [vmem:[%s388] sm:$0xff] %vm456, %v503
        %552 = vst.msk [vmem:[%s388 + $0x8] sm:$0xff] %vm456, %v504
        %553 = vst.msk [vmem:[%s381] sm:$0xff] %vm403, %v526
        %554 = vst.msk [vmem:[%s381 + $0x8] sm:$0xff] %vm403, %v549
        %s555 = sand.u32 %s175, 1
        %s556 = scalar_lea.sflag [#allocation4], %s555
        %s557 = sand.u32 %s175, 1
        %s558 = smul.addr %s557, 16
        %s559 = scalar_lea.vmem [#allocation10], %s558
        %s560 = sand.u32 %s205, 1
        %s561 = scalar_lea.sflag [#allocation12], %s560
        %s562 = sand.u32 %s205, 1
        %s563 = smul.addr %s562, 16
        %s564 = scalar_lea.vmem [#allocation11], %s563
        // Predicated region
        $region53: #{tpu_custom_call.1} parent=35 // pred_check
          %p565 = pneg %p185
        $region54: #{tpu_custom_call.1} parent=35 // pred_check_branch
          %567 = sbr.rel (%p565) target = $region56
        $region55: #{tpu_custom_call.1} parent=35 // pred_region
          %s568 = smul.u32 2, %s36
          %570 = vsyncadd %s556, 0
          %s571 = sadd.s32 %s37, %s568
          %s572 = smul.addr %s35, 2
          %s573 = sadd.s32 %s571, %s572
          %s574 = smul.addr %s573, 8
          %s575 = scalar_lea.hbm %s4, %s574
          %s576 = sshll.u32 %s559, 4
          %s577 = int_to_ptr.vmem [resolvable:$true] %s576
          %s578 = sshll.u32 %s575, 4
          %s579 = int_to_ptr.hbm [resolvable:$true] %s578
          %584 = dma.vmem_to_hbm [thread:$0]  %s577, 256, %s579, %s556, 128, 128, 8
        $region56: #{tpu_custom_call.1} parent=35 // pred_fallthru
          _
        // Predicated region
        $region57: #{tpu_custom_call.1} parent=35 // pred_check
          %p585 = pneg %p215
        $region58: #{tpu_custom_call.1} parent=35 // pred_check_branch
          %587 = sbr.rel (%p585) target = $region60
        $region59: #{tpu_custom_call.1} parent=35 // pred_region
          %s588 = smul.u32 2, %s36
          %590 = vsyncadd %s561, 0
          %s591 = sadd.s32 %s37, %s588
          %s592 = smul.addr %s35, 2
          %s593 = sadd.s32 %s591, %s592
          %s594 = smul.addr %s593, 8
          %s595 = scalar_lea.hbm %s5, %s594
          %s596 = sshll.u32 %s564, 4
          %s597 = int_to_ptr.vmem [resolvable:$true] %s596
          %s598 = sshll.u32 %s595, 4
          %s599 = int_to_ptr.hbm [resolvable:$true] %s598
          %604 = dma.vmem_to_hbm [thread:$0]  %s597, 256, %s599, %s561, 128, 128, 8
        $region60: #{tpu_custom_call.1} parent=35 // pred_fallthru
          _
      $region36: #{tpu_custom_call.1} parent=5 // pred_fallthru
        _
      %p605 = scmp.le.s32.totalorder 2, %s25
      // Predicated region
      $region61: #{tpu_custom_call.1} parent=5 // pred_check
        %p606 = pneg %p605
      $region62: #{tpu_custom_call.1} parent=5 // pred_check_branch
        %608 = sbr.rel (%p606) target = $region64
      $region63: #{tpu_custom_call.1} parent=5 // pred_region
        %s609 = ssub.s32 %s25, 2
        // Predicated region
        $region65: #{tpu_custom_call.1} parent=63 // pred_check
          %p610 = pneg %p191
        $region66: #{tpu_custom_call.1} parent=63 // pred_check_branch
          %612 = sbr.rel (%p610) target = $region68
        $region67: #{tpu_custom_call.1} parent=63 // pred_region
          %s613 = sand.u32 %s176, 1
          %s614 = scalar_lea.sflag [#allocation4], %s613
          %s615 = sand.u32 %s176, 1
          %s616 = smul.addr %s615, 16
          %s617 = scalar_lea.vmem [#allocation10], %s616
          %619 = dma.done %s614, 256
        $region68: #{tpu_custom_call.1} parent=63 // pred_fallthru
          _
        // Predicated region
        $region69: #{tpu_custom_call.1} parent=63 // pred_check
          %p620 = pneg %p221
        $region70: #{tpu_custom_call.1} parent=63 // pred_check_branch
          %622 = sbr.rel (%p620) target = $region72
        $region71: #{tpu_custom_call.1} parent=63 // pred_region
          %s623 = sand.u32 %s206, 1
          %s624 = scalar_lea.sflag [#allocation12], %s623
          %s625 = sand.u32 %s206, 1
          %s626 = smul.addr %s625, 16
          %s627 = scalar_lea.vmem [#allocation11], %s626
          %629 = dma.done %s624, 256
        $region72: #{tpu_custom_call.1} parent=63 // pred_fallthru
          _
      $region64: #{tpu_custom_call.1} parent=5 // pred_fallthru
        _
    $region6: #{tpu_custom_call.1} parent=1 // loop_footer
      %s29 = sadd.s32 1, %s25
    $region7: #{tpu_custom_call.1} parent=1 // loop_footer_branch
      %24 = sbr.rel target = $region3
    $region8: #{tpu_custom_call.1} parent=1 // loop_exit
      _
    %630 = vsyncpa [#allocation3], 1
    %s631 = scalar_lea.sflag [#allocation3], 1
    %632 = vsyncpa %s631, 1
    %633 = vsyncpa [#allocation6], 1
    %634 = vsyncpa [#allocation9], 1
    %s635 = scalar_lea.sflag [#allocation9], 1
    %636 = vsyncpa %s635, 1
    %637 = vsyncpa [#allocation4], 1
    %s638 = scalar_lea.sflag [#allocation4], 1
    %639 = vsyncpa %s638, 1
    %640 = vsyncpa [#allocation12], 1
    %s641 = scalar_lea.sflag [#allocation12], 1
    %642 = vsyncpa %s641, 1

// kernel: tpu_custom_call.1
$region0: #{tpu_custom_call.1}
  #allocation0 [shape = 'u32[]', space=smem, size = 0x4, offset = 0x4, fixed_abs, tag = 'smem constant byte address 0x4 - core index']
  #allocation1 [shape = 'u32[72,128]{1,0:T(1,128)}', space=vmem, size = 0x9000, scoped, tag = 'internal scratch']
  %s0 = inlined_call_operand.hbm [shape: f32[2,2,8,32], index: 0, kind: input, shape index: {}]
  %s1 = inlined_call_operand.hbm [shape: f32[2,2,8,32], index: 1, kind: input, shape index: {}]
  %s2 = inlined_call_operand.hbm [shape: f32[2,2,8,32], index: 2, kind: input, shape index: {}]
  %s3 = inlined_call_operand.hbm [shape: f32[2,1,8,8], index: 3, kind: input, shape index: {}]
  %s4 = inlined_call_operand.hbm [shape: f32[2,2,8,32], index: 4, kind: output, shape index: {0}]
  %s5 = inlined_call_operand.hbm [shape: f32[2,2,8,8], index: 5, kind: output, shape index: {1}]
  %6 = xla_tuple %s4, %s5
  %s7 = sld [smem:[#allocation0]]
  $region73: #{tpu_custom_call.1} parent=0
    _
  %s9 = ssub.s32 1, %s7
  %s10 = scalar_select 0, %s9, %s7
  $region1: #{tpu_custom_call.1} parent=0
    #allocation2 [shape = 'u8[16384]{0}', space=vmem, size = 0x4000, scoped, tag = 'input window, operand 0']
    #allocation3 [shape = 's32[2]{0}', space=sflag, size = 0x8, scoped, tag = 'scoped memory for tpu_custom_call.1']
    #allocation4 [shape = 's32[2]{0}', space=sflag, size = 0x8, scoped, tag = 'scoped memory for tpu_custom_call.1']
    #allocation5 [shape = 'u8[16384]{0}', space=vmem, size = 0x4000, scoped, tag = 'input window, operand 1']
    #allocation6 [shape = 's32[2]{0}', space=sflag, size = 0x8, scoped, tag = 'scoped memory for tpu_custom_call.1']
    #allocation7 [shape = 'u8[16384]{0}', space=vmem, size = 0x4000, scoped, tag = 'input window, operand 2']
    #allocation8 [shape = 'u8[8192]{0}', space=vmem, size = 0x2000, scoped, tag = 'input window, operand 3']
    #allocation9 [shape = 's32[2]{0}', space=sflag, size = 0x8, scoped, tag = 'scoped memory for tpu_custom_call.1']
    #allocation10 [shape = 'u8[16384]{0}', space=vmem, size = 0x4000, scoped, tag = 'output window, operand 0']
    #allocation11 [shape = 'u8[16384]{0}', space=vmem, size = 0x4000, scoped, tag = 'output window, operand 1']
    #allocation12 [shape = 's32[2]{0}', space=sflag, size = 0x8, scoped, tag = 'scoped memory for tpu_custom_call.1']
    %11 = vsyncpa [#allocation3], 0
    %s12 = scalar_lea.sflag [#allocation3], 1
    %13 = vsyncpa %s12, 0
    %14 = vsyncpa [#allocation6], 0
    %s15 = scalar_lea.sflag [#allocation6], 1
    %16 = vsyncpa %s15, 0
    %17 = vsyncpa [#allocation9], 0
    %s18 = scalar_lea.sflag [#allocation9], 1
    %19 = vsyncpa %s18, 0
    %20 = vsyncpa [#allocation4], 0
    %s21 = scalar_lea.sflag [#allocation4], 1
    %22 = vsyncpa %s21, 0
    %23 = vsyncpa [#allocation12], 0
    %s24 = scalar_lea.sflag [#allocation12], 1
    %25 = vsyncpa %s24, 0
    loop: start=0, step=1, limit=4
    $region2: #{tpu_custom_call.1} parent=1 // loop_pre_header
      _
    $region3: #{tpu_custom_call.1} parent=1 // loop_header
      %s27 = sphi 0, %s31
      %p28 = scmp.ge.s32.totalorder %s27, 4
      %s34 = sphi 0, %s53
      %s35 = sphi 0, %s49
      %s36 = sphi 0, %s45
      %s37 = sphi 0, %s34
      %s38 = sphi 0, %s35
      %s39 = sphi 0, %s36
      %s40 = sphi 0, %s37
      %s41 = sphi 0, %s38
      %s42 = sphi 0, %s39
      %s60 = sphi 0, %s62
      %s63 = sphi 0, %s60
      %s64 = sphi 0, %s63
      %s80 = sphi 0, %s64
      %s88 = sphi 0, %s90
      %s91 = sphi 0, %s88
      %s92 = sphi 0, %s91
      %s108 = sphi 0, %s92
      %s116 = sphi 0, %s118
      %s119 = sphi 0, %s116
      %s120 = sphi 0, %s119
      %s136 = sphi 0, %s120
      %s144 = sphi 0, %s146
      %s147 = sphi 0, %s144
      %s148 = sphi 0, %s147
      %s164 = sphi 0, %s148
      %s174 = sphi 0, %s176
      %s177 = sphi 0, %s174
      %s178 = sphi 0, %s177
      %s194 = sphi 0, %s178
      %s204 = sphi 0, %s206
      %s207 = sphi 0, %s204
      %s208 = sphi 0, %s207
      %s224 = sphi 0, %s208
    $region4: #{tpu_custom_call.1} parent=1 // loop_header_branch
      %30 = sbr.rel (%p28) target = $region8
    $region5: #{tpu_custom_call.1} parent=1 // loop_body
      %s32 = ssub.s32 %s27, 1
      %s33 = ssub.s32 %s27, 2
      %s43 = sadd.s32 1, %s36
      %p44 = scmp.ge.s32.totalorder %s43, 1
      %s45 = scalar_select %p44, 0, %s43
      %s46 = sadd.s32 1, %s35
      %s47 = scalar_select %p44, %s46, %s35
      %p48 = scmp.ge.s32.totalorder %s47, 1
      %s49 = scalar_select %p48, 0, %s47
      %s50 = sadd.s32 1, %s34
      %s51 = scalar_select %p48, %s50, %s34
      %p52 = scmp.ge.s32.totalorder %s51, 2
      %s53 = scalar_select %p52, 0, %s51
      %s54 = ssub.s32 %s34, %s53
      %s55 = ssub.s32 %s35, %s49
      %s56 = sor.u32 %s54, %s55
      %s57 = ssub.s32 %s36, %s45
      %s58 = sor.u32 %s56, %s57
      %p59 = scmp.eq.s32.totalorder %s58, 0
      %s61 = sadd.s32 %s60, 1
      %s62 = scalar_select %p59, %s60, %s61
      %p65 = pneg %p59
      %p66 = scmp.eq.s32.totalorder %s27, 1
      %p67 = por %p65, %p66
      %p68 = scmp.ne.s32.totalorder %s60, %s63
      %p69 = scmp.eq.s32.totalorder %s27, 0
      %p70 = por %p68, %p69
      %p71 = scmp.ne.s32.totalorder %s60, %s63
      %p72 = scmp.eq.s32.totalorder %s32, 1
      %p73 = por %p71, %p72
      %p74 = scmp.ne.s32.totalorder %s63, %s64
      %p75 = scmp.eq.s32.totalorder %s32, 0
      %p76 = por %p74, %p75
      %p77 = scmp.ne.s32.totalorder %s63, %s64
      %p78 = scmp.eq.s32.totalorder %s33, 1
      %p79 = por %p77, %p78
      %p81 = scmp.ne.s32.totalorder %s64, %s80
      %p82 = scmp.eq.s32.totalorder %s33, 0
      %p83 = por %p81, %p82
      %s84 = ssub.s32 %s34, %s53
      %s85 = ssub.s32 %s35, %s49
      %s86 = sor.u32 %s84, %s85
      %p87 = scmp.eq.s32.totalorder %s86, 0
      %s89 = sadd.s32 %s88, 1
      %s90 = scalar_select %p87, %s88, %s89
      %p93 = pneg %p87
      %p94 = scmp.eq.s32.totalorder %s27, 1
      %p95 = por %p93, %p94
      %p96 = scmp.ne.s32.totalorder %s88, %s91
      %p97 = scmp.eq.s32.totalorder %s27, 0
      %p98 = por %p96, %p97
      %p99 = scmp.ne.s32.totalorder %s88, %s91
      %p100 = scmp.eq.s32.totalorder %s32, 1
      %p101 = por %p99, %p100
      %p102 = scmp.ne.s32.totalorder %s91, %s92
      %p103 = scmp.eq.s32.totalorder %s32, 0
      %p104 = por %p102, %p103
      %p105 = scmp.ne.s32.totalorder %s91, %s92
      %p106 = scmp.eq.s32.totalorder %s33, 1
      %p107 = por %p105, %p106
      %p109 = scmp.ne.s32.totalorder %s92, %s108
      %p110 = scmp.eq.s32.totalorder %s33, 0
      %p111 = por %p109, %p110
      %s112 = ssub.s32 %s34, %s53
      %s113 = ssub.s32 %s35, %s49
      %s114 = sor.u32 %s112, %s113
      %p115 = scmp.eq.s32.totalorder %s114, 0
      %s117 = sadd.s32 %s116, 1
      %s118 = scalar_select %p115, %s116, %s117
      %p121 = pneg %p115
      %p122 = scmp.eq.s32.totalorder %s27, 1
      %p123 = por %p121, %p122
      %p124 = scmp.ne.s32.totalorder %s116, %s119
      %p125 = scmp.eq.s32.totalorder %s27, 0
      %p126 = por %p124, %p125
      %p127 = scmp.ne.s32.totalorder %s116, %s119
      %p128 = scmp.eq.s32.totalorder %s32, 1
      %p129 = por %p127, %p128
      %p130 = scmp.ne.s32.totalorder %s119, %s120
      %p131 = scmp.eq.s32.totalorder %s32, 0
      %p132 = por %p130, %p131
      %p133 = scmp.ne.s32.totalorder %s119, %s120
      %p134 = scmp.eq.s32.totalorder %s33, 1
      %p135 = por %p133, %p134
      %p137 = scmp.ne.s32.totalorder %s120, %s136
      %p138 = scmp.eq.s32.totalorder %s33, 0
      %p139 = por %p137, %p138
      %s140 = ssub.s32 %s34, %s53
      %s141 = ssub.s32 %s36, %s45
      %s142 = sor.u32 %s140, %s141
      %p143 = scmp.eq.s32.totalorder %s142, 0
      %s145 = sadd.s32 %s144, 1
      %s146 = scalar_select %p143, %s144, %s145
      %p149 = pneg %p143
      %p150 = scmp.eq.s32.totalorder %s27, 1
      %p151 = por %p149, %p150
      %p152 = scmp.ne.s32.totalorder %s144, %s147
      %p153 = scmp.eq.s32.totalorder %s27, 0
      %p154 = por %p152, %p153
      %p155 = scmp.ne.s32.totalorder %s144, %s147
      %p156 = scmp.eq.s32.totalorder %s32, 1
      %p157 = por %p155, %p156
      %p158 = scmp.ne.s32.totalorder %s147, %s148
      %p159 = scmp.eq.s32.totalorder %s32, 0
      %p160 = por %p158, %p159
      %p161 = scmp.ne.s32.totalorder %s147, %s148
      %p162 = scmp.eq.s32.totalorder %s33, 1
      %p163 = por %p161, %p162
      %p165 = scmp.ne.s32.totalorder %s148, %s164
      %p166 = scmp.eq.s32.totalorder %s33, 0
      %p167 = por %p165, %p166
      %s168 = ssub.s32 %s34, %s53
      %s169 = ssub.s32 %s35, %s49
      %s170 = sor.u32 %s168, %s169
      %s171 = ssub.s32 %s36, %s45
      %s172 = sor.u32 %s170, %s171
      %p173 = scmp.eq.s32.totalorder %s172, 0
      %s175 = sadd.s32 %s174, 1
      %s176 = scalar_select %p173, %s174, %s175
      %p179 = pneg %p173
      %p180 = scmp.eq.s32.totalorder %s27, 1
      %p181 = por %p179, %p180
      %p182 = scmp.ne.s32.totalorder %s174, %s177
      %p183 = scmp.eq.s32.totalorder %s27, 0
      %p184 = por %p182, %p183
      %p185 = scmp.ne.s32.totalorder %s174, %s177
      %p186 = scmp.eq.s32.totalorder %s32, 1
      %p187 = por %p185, %p186
      %p188 = scmp.ne.s32.totalorder %s177, %s178
      %p189 = scmp.eq.s32.totalorder %s32, 0
      %p190 = por %p188, %p189
      %p191 = scmp.ne.s32.totalorder %s177, %s178
      %p192 = scmp.eq.s32.totalorder %s33, 1
      %p193 = por %p191, %p192
      %p195 = scmp.ne.s32.totalorder %s178, %s194
      %p196 = scmp.eq.s32.totalorder %s33, 0
      %p197 = por %p195, %p196
      %s198 = ssub.s32 %s34, %s53
      %s199 = ssub.s32 %s35, %s49
      %s200 = sor.u32 %s198, %s199
      %s201 = ssub.s32 %s36, %s45
      %s202 = sor.u32 %s200, %s201
      %p203 = scmp.eq.s32.totalorder %s202, 0
      %s205 = sadd.s32 %s204, 1
      %s206 = scalar_select %p203, %s204, %s205
      %p209 = pneg %p203
      %p210 = scmp.eq.s32.totalorder %s27, 1
      %p211 = por %p209, %p210
      %p212 = scmp.ne.s32.totalorder %s204, %s207
      %p213 = scmp.eq.s32.totalorder %s27, 0
      %p214 = por %p212, %p213
      %p215 = scmp.ne.s32.totalorder %s204, %s207
      %p216 = scmp.eq.s32.totalorder %s32, 1
      %p217 = por %p215, %p216
      %p218 = scmp.ne.s32.totalorder %s207, %s208
      %p219 = scmp.eq.s32.totalorder %s32, 0
      %p220 = por %p218, %p219
      %p221 = scmp.ne.s32.totalorder %s207, %s208
      %p222 = scmp.eq.s32.totalorder %s33, 1
      %p223 = por %p221, %p222
      %p225 = scmp.ne.s32.totalorder %s208, %s224
      %p226 = scmp.eq.s32.totalorder %s33, 0
      %p227 = por %p225, %p226
      %p228 = scmp.le.s32.totalorder 1, %s27
      %p229 = scmp.lt.s32.totalorder %s27, 3
      %p230 = pnand %p228, %p229
      %p231 = pneg %p230
      // Predicated region
      $region9: #{tpu_custom_call.1} parent=5 // pred_check
        _
      $region10: #{tpu_custom_call.1} parent=5 // pred_check_branch
        %233 = sbr.rel (%p230) target = $region12
      $region11: #{tpu_custom_call.1} parent=5 // pred_region
        %s234 = ssub.s32 %s27, 1
      $region12: #{tpu_custom_call.1} parent=5 // pred_fallthru
        _
      %p235 = scmp.lt.s32.totalorder %s27, 2
      // Predicated region
      $region13: #{tpu_custom_call.1} parent=5 // pred_check
        %p236 = pneg %p235
      $region14: #{tpu_custom_call.1} parent=5 // pred_check_branch
        %238 = sbr.rel (%p236) target = $region16
      $region15: #{tpu_custom_call.1} parent=5 // pred_region
        // Predicated region
        $region17: #{tpu_custom_call.1} parent=15 // pred_check
          %p239 = pneg %p70
        $region18: #{tpu_custom_call.1} parent=15 // pred_check_branch
          %241 = sbr.rel (%p239) target = $region20
        $region19: #{tpu_custom_call.1} parent=15 // pred_region
          %s242 = sand.u32 %s60, 1
          %s243 = scalar_lea.sflag [#allocation3], %s242
          %s244 = sand.u32 %s60, 1
          %s245 = smul.addr %s244, 16
          %s246 = scalar_lea.vmem [#allocation2], %s245
          %s247 = smul.u32 2, %s35
          %249 = vsyncadd %s243, 0
          %s250 = sadd.s32 %s36, %s247
          %s251 = smul.addr %s34, 2
          %s252 = sadd.s32 %s250, %s251
          %s253 = smul.addr %s252, 8
          %s254 = scalar_lea.hbm %s0, %s253
          %s255 = sshll.u32 %s254, 4
          %s256 = int_to_ptr.hbm [resolvable:$true] %s255
          %s257 = sshll.u32 %s246, 4
          %s258 = int_to_ptr.vmem [resolvable:$true] %s257
          %263 = dma.hbm_to_vmem [thread:$0]  %s256, 256, %s258, %s243, 128, 128, 8
        $region20: #{tpu_custom_call.1} parent=15 // pred_fallthru
          _
        // Predicated region
        $region21: #{tpu_custom_call.1} parent=15 // pred_check
          %p264 = pneg %p98
        $region22: #{tpu_custom_call.1} parent=15 // pred_check_branch
          %266 = sbr.rel (%p264) target = $region24
        $region23: #{tpu_custom_call.1} parent=15 // pred_region
          %s267 = sand.u32 %s27, 1
          %s268 = scalar_lea.sflag [#allocation6], %s267
          %s269 = sand.u32 %s88, 1
          %s270 = smul.addr %s269, 16
          %s271 = scalar_lea.vmem [#allocation5], %s270
          %s272 = smul.u32 2, %s35
          %274 = vsyncadd %s268, 0
          %s275 = smul.addr %s34, 2
          %s276 = sadd.s32 %s272, %s275
          %s277 = smul.addr %s276, 8
          %s278 = scalar_lea.hbm %s1, %s277
          %s279 = sshll.u32 %s278, 4
          %s280 = int_to_ptr.hbm [resolvable:$true] %s279
          %s281 = sshll.u32 %s271, 4
          %s282 = int_to_ptr.vmem [resolvable:$true] %s281
          %287 = dma.hbm_to_vmem [thread:$0]  %s280, 256, %s282, %s268, 128, 128, 8
        $region24: #{tpu_custom_call.1} parent=15 // pred_fallthru
          _
        // Predicated region
        $region25: #{tpu_custom_call.1} parent=15 // pred_check
          %p288 = pneg %p126
        $region26: #{tpu_custom_call.1} parent=15 // pred_check_branch
          %290 = sbr.rel (%p288) target = $region28
        $region27: #{tpu_custom_call.1} parent=15 // pred_region
          %s291 = sand.u32 %s27, 1
          %s292 = scalar_lea.sflag [#allocation6], %s291
          %s293 = sand.u32 %s116, 1
          %s294 = smul.addr %s293, 16
          %s295 = scalar_lea.vmem [#allocation7], %s294
          %s296 = smul.u32 2, %s35
          %298 = vsyncadd %s292, 0
          %s299 = smul.addr %s34, 2
          %s300 = sadd.s32 %s296, %s299
          %s301 = smul.addr %s300, 8
          %s302 = scalar_lea.hbm %s2, %s301
          %s303 = sshll.u32 %s302, 4
          %s304 = int_to_ptr.hbm [resolvable:$true] %s303
          %s305 = sshll.u32 %s295, 4
          %s306 = int_to_ptr.vmem [resolvable:$true] %s305
          %311 = dma.hbm_to_vmem [thread:$0]  %s304, 256, %s306, %s292, 128, 128, 8
        $region28: #{tpu_custom_call.1} parent=15 // pred_fallthru
          _
        // Predicated region
        $region29: #{tpu_custom_call.1} parent=15 // pred_check
          %p312 = pneg %p154
        $region30: #{tpu_custom_call.1} parent=15 // pred_check_branch
          %314 = sbr.rel (%p312) target = $region32
        $region31: #{tpu_custom_call.1} parent=15 // pred_region
          %s315 = sand.u32 %s144, 1
          %s316 = scalar_lea.sflag [#allocation9], %s315
          %s317 = sand.u32 %s144, 1
          %s318 = smul.addr %s317, 8
          %s319 = scalar_lea.vmem [#allocation8], %s318
          %321 = vsyncadd %s316, 0
          %s322 = sadd.s32 %s36, %s34
          %s323 = smul.addr %s322, 8
          %s324 = scalar_lea.hbm %s3, %s323
          %s326 = sshll.u32 %s324, 4
          %s327 = int_to_ptr.hbm [resolvable:$true] %s326
          %s328 = sshll.u32 %s319, 4
          %s329 = int_to_ptr.vmem [resolvable:$true] %s328
          %331 = dma.hbm_to_vmem [thread:$0]  %s327, 128, %s329, %s316
        $region32: #{tpu_custom_call.1} parent=15 // pred_fallthru
          _
      $region16: #{tpu_custom_call.1} parent=5 // pred_fallthru
        _
      %p332 = scmp.le.s32.totalorder 1, %s27
      %p333 = scmp.lt.s32.totalorder %s27, 3
      %p334 = pnand %p332, %p333
      %p335 = pneg %p334
      // Predicated region
      $region33: #{tpu_custom_call.1} parent=5 // pred_check
        _
      $region34: #{tpu_custom_call.1} parent=5 // pred_check_branch
        %337 = sbr.rel (%p334) target = $region36
      $region35: #{tpu_custom_call.1} parent=5 // pred_region
        %s338 = ssub.s32 %s27, 1
        %s339 = sand.u32 %s63, 1
        %s340 = scalar_lea.sflag [#allocation3], %s339
        %s341 = sand.u32 %s63, 1
        %s342 = smul.addr %s341, 16
        %s343 = scalar_lea.vmem [#allocation2], %s342
        // Predicated region
        $region37: #{tpu_custom_call.1} parent=35 // pred_check
          %p344 = pneg %p76
        $region38: #{tpu_custom_call.1} parent=35 // pred_check_branch
          %346 = sbr.rel (%p344) target = $region40
        $region39: #{tpu_custom_call.1} parent=35 // pred_region
          %348 = dma.done %s340, 256
        $region40: #{tpu_custom_call.1} parent=35 // pred_fallthru
          _
        %s349 = sand.u32 %s32, 1
        %s350 = scalar_lea.sflag [#allocation6], %s349
        %s351 = sand.u32 %s91, 1
        %s352 = smul.addr %s351, 16
        %s353 = scalar_lea.vmem [#allocation5], %s352
        // Predicated region
        $region41: #{tpu_custom_call.1} parent=35 // pred_check
          %p354 = pneg %p104
        $region42: #{tpu_custom_call.1} parent=35 // pred_check_branch
          %356 = sbr.rel (%p354) target = $region44
        $region43: #{tpu_custom_call.1} parent=35 // pred_region
          %358 = dma.done %s350, 256
        $region44: #{tpu_custom_call.1} parent=35 // pred_fallthru
          _
        %s359 = sand.u32 %s32, 1
        %s360 = scalar_lea.sflag [#allocation6], %s359
        %s361 = sand.u32 %s119, 1
        %s362 = smul.addr %s361, 16
        %s363 = scalar_lea.vmem [#allocation7], %s362
        // Predicated region
        $region45: #{tpu_custom_call.1} parent=35 // pred_check
          %p364 = pneg %p132
        $region46: #{tpu_custom_call.1} parent=35 // pred_check_branch
          %366 = sbr.rel (%p364) target = $region48
        $region47: #{tpu_custom_call.1} parent=35 // pred_region
          %368 = dma.done %s360, 256
        $region48: #{tpu_custom_call.1} parent=35 // pred_fallthru
          _
        %s369 = sand.u32 %s147, 1
        %s370 = scalar_lea.sflag [#allocation9], %s369
        %s371 = sand.u32 %s147, 1
        %s372 = smul.addr %s371, 8
        %s373 = scalar_lea.vmem [#allocation8], %s372
        // Predicated region
        $region49: #{tpu_custom_call.1} parent=35 // pred_check
          %p374 = pneg %p160
        $region50: #{tpu_custom_call.1} parent=35 // pred_check_branch
          %376 = sbr.rel (%p374) target = $region52
        $region51: #{tpu_custom_call.1} parent=35 // pred_region
          %378 = dma.done %s370, 128
        $region52: #{tpu_custom_call.1} parent=35 // pred_fallthru
          _
        %s379 = sand.u32 %s63, 1
        %s380 = scalar_lea.sflag [#allocation3], %s379
        %s381 = sand.u32 %s63, 1
        %s382 = smul.addr %s381, 16
        %s383 = scalar_lea.vmem [#allocation2], %s382
        %p384 = pneg %p76
        %p385 = pneg %p73
        %s386 = sand.u32 %s32, 1
        %s387 = scalar_lea.sflag [#allocation6], %s386
        %s388 = sand.u32 %s91, 1
        %s389 = smul.addr %s388, 16
        %s390 = scalar_lea.vmem [#allocation5], %s389
        %p391 = pneg %p104
        %p392 = pneg %p101
        %s393 = sand.u32 %s32, 1
        %s394 = scalar_lea.sflag [#allocation6], %s393
        %s395 = sand.u32 %s119, 1
        %s396 = smul.addr %s395, 16
        %s397 = scalar_lea.vmem [#allocation7], %s396
        %p398 = pneg %p132
        %p399 = pneg %p129
        %s400 = sand.u32 %s147, 1
        %s401 = scalar_lea.sflag [#allocation9], %s400
        %s402 = sand.u32 %s147, 1
        %s403 = smul.addr %s402, 8
        %s404 = scalar_lea.vmem [#allocation8], %s403
        %p405 = pneg %p160
        %p406 = pneg %p157
        %p407 = pneg %p190
        %p408 = pneg %p187
        %s409 = sand.u32 %s177, 1
        %s410 = scalar_lea.sflag [#allocation4], %s409
        %s411 = sand.u32 %s177, 1
        %s412 = smul.addr %s411, 16
        %s413 = scalar_lea.vmem [#allocation10], %s412
        %p414 = pneg %p220
        %p415 = pneg %p217
        %s416 = sand.u32 %s207, 1
        %s417 = scalar_lea.sflag [#allocation12], %s416
        %s418 = sand.u32 %s207, 1
        %s419 = smul.addr %s418, 16
        %s420 = scalar_lea.vmem [#allocation11], %s419
        %s421 = smul.u32 2, %s38
        %s422 = smul.u32 2, %s38
        %s423 = smul.u32 2, %s38
        %s424 = smul.u32 2, %s38
        %s425 = smul.u32 2, %s38
        %v426 = vld [vmem:[%s343] sm:$0xff]
        %v427 = vld [vmem:[%s343 + $0x8] sm:$0xff]
        %v428 = vmul.f32 %v426, 0.17677669
        %v429 = vmul.f32 %v427, 0.17677669
        %v430 = vld [vmem:[%s353] sm:$0xff]
        %v431 = vld [vmem:[%s353 + $0x8] sm:$0xff]
        %v432 = vld [vmem:[%s363] sm:$0xff]
        %v433 = vld [vmem:[%s363 + $0x8] sm:$0xff]
        %v434 = vld [vmem:[%s373] sm:$0xff]
        %vm435 = vcmask 261120
        %v437 = vsel %vm435, %v428, 0
        %v440 = vsel %vm435, %v430, 0
        %442 = vmatpush.xpose.msra.mxu0 0.0
        %443 = vmatpush.xpose.msra.mxu0 0.0
        %444 = vmatpush.xpose.msra.mxu0 0.0
        %445 = vmatpush.xpose.msra.mxu0 0.0
        %446 = vmatpush.xpose.msra.mxu0 0.0
        %447 = vmatpush.xpose.msra.mxu0 0.0
        %448 = vmatpush.xpose.msra.mxu0 0.0
        %449 = vmatpush.xpose.msra.mxu0 0.0
        %450 = vmatpush.xpose.msra.mxu0 0.0
        %451 = vmatpush.xpose.msra.mxu0 0.0
        %452 = vmatpush.xpose.msra.mxu0 0.0
        %453 = vmatpush.xpose.msra.mxu0 0.0
        %454 = vmatpush.xpose.msra.mxu0 0.0
        %455 = vmatpush.xpose.msra.mxu0 0.0
        %456 = vmatpush.xpose.msra.mxu0 0.0
        %457 = vmatpush.xpose.msra.mxu0 %v440
        %458 = vmatmul.f32.gmra.mxu0 %v437
        %v459 = vpop.f32.mrf.mxu0
        %v460 = vadd.f32 %v434, %v459
        %461 = vdwg.mxu0
        %v463 = vsel %vm435, %v429, 0
        %v466 = vsel %vm435, %v431, 0
        %468 = vmatpush.xpose.msra.mxu0 0.0
        %469 = vmatpush.xpose.msra.mxu0 0.0
        %470 = vmatpush.xpose.msra.mxu0 0.0
        %471 = vmatpush.xpose.msra.mxu0 0.0
        %472 = vmatpush.xpose.msra.mxu0 0.0
        %473 = vmatpush.xpose.msra.mxu0 0.0
        %474 = vmatpush.xpose.msra.mxu0 0.0
        %475 = vmatpush.xpose.msra.mxu0 0.0
        %476 = vmatpush.xpose.msra.mxu0 0.0
        %477 = vmatpush.xpose.msra.mxu0 0.0
        %478 = vmatpush.xpose.msra.mxu0 0.0
        %479 = vmatpush.xpose.msra.mxu0 0.0
        %480 = vmatpush.xpose.msra.mxu0 0.0
        %481 = vmatpush.xpose.msra.mxu0 0.0
        %482 = vmatpush.xpose.msra.mxu0 0.0
        %483 = vmatpush.xpose.msra.mxu0 %v466
        %484 = vmatmul.f32.gmra.mxu0 %v463
        %v485 = vpop.f32.mrf.mxu0
        %v486 = vadd.f32 %v434, %v485
        %487 = vdwg.mxu0
        %vm488 = vcmask 64512
        %v489 = vsel %vm488, %v460, -inf
        %490 = vmax.xlane.f32.xlu0 %v489
        %v491 = vpop.xlane.xlu0 %490
        %v492 = vsel %vm488, %v486, -inf
        %493 = vmax.xlane.f32.xlu0 %v492
        %v494 = vpop.xlane.xlu0 %493
        %v495 = vsub.f32 %v460, %v491
        %v496 = vsub.f32 %v486, %v494
        %v497 = vmul.f32 %v495, 1.442695
        %v498 = vpow.pop %v497
        %v499 = vmul.f32 %v496, 1.442695
        %v500 = vpow.pop %v499
        %v501 = vsel %vm488, %v498, 0.0
        %502 = vadd.xlane.f32.xlu0 %v501
        %v503 = vpop.xlane.xlu0 %502
        %v504 = vsel %vm488, %v500, 0.0
        %505 = vadd.xlane.f32.xlu0 %v504
        %v506 = vpop.xlane.xlu0 %505
        %v507 = vrcp.pop %v503
        %v508 = vmul.f32 %v503, %v507
        %v509 = vsub.f32 1.0, %v508
        %v510 = vmul.f32 %v507, %v509
        %v511 = vadd.f32 %v507, %v510
        %vm512 = vweird.f32 %v503
        %vm513 = vweird.f32 %v507
        %vm514 = vmor %vm512, %vm513
        %v515 = vsel %vm514, %v507, %v511
        %v516 = vand.u32 2147483647, %v503
        %vm517 = vcmp.eq.f32.partialorder %v516, 8.507059e+37
        %v518 = vand.u32 %v503, 2147483648
        %v519 = vor.u32 1.1754944e-38, %v518
        %v520 = vsel %vm517, %v519, %v515
        %v521 = vrcp.pop %v506
        %v522 = vmul.f32 %v506, %v521
        %v523 = vsub.f32 1.0, %v522
        %v524 = vmul.f32 %v521, %v523
        %v525 = vadd.f32 %v521, %v524
        %vm526 = vweird.f32 %v506
        %vm527 = vweird.f32 %v521
        %vm528 = vmor %vm526, %vm527
        %v529 = vsel %vm528, %v521, %v525
        %v530 = vand.u32 2147483647, %v506
        %vm531 = vcmp.eq.f32.partialorder %v530, 8.507059e+37
        %v532 = vand.u32 %v506, 2147483648
        %v533 = vor.u32 1.1754944e-38, %v532
        %v534 = vsel %vm531, %v533, %v529
        %v535 = vmul.f32 %v498, %v520
        %v536 = vmul.f32 %v500, %v534
        %v538 = vsel %vm488, %v535, 0
        %540 = vmatpush.msra.mxu0 0.0
        %541 = vmatpush.msra.mxu0 0.0
        %542 = vmatpush.msra.mxu0 0.0
        %543 = vmatpush.msra.mxu0 0.0
        %544 = vmatpush.msra.mxu0 0.0
        %545 = vmatpush.msra.mxu0 0.0
        %546 = vmatpush.msra.mxu0 0.0
        %547 = vmatpush.msra.mxu0 0.0
        %548 = vmatpush.msra.mxu0 0.0
        %549 = vmatpush.msra.mxu0 0.0
        %550 = vmatpush.msra.mxu0 0.0
        %551 = vmatpush.msra.mxu0 0.0
        %552 = vmatpush.msra.mxu0 0.0
        %553 = vmatpush.msra.mxu0 0.0
        %554 = vmatpush.msra.mxu0 0.0
        %555 = vmatpush.msra.mxu0 %v432
        %556 = vmatmul.f32.gmra.mxu0 %v538
        %v557 = vpop.f32.mrf.mxu0
        %v558 = vadd.f32 0.0, %v557
        %559 = vdwg.mxu0
        %v561 = vsel %vm488, %v536, 0
        %563 = vmatpush.msra.mxu0 0.0
        %564 = vmatpush.msra.mxu0 0.0
        %565 = vmatpush.msra.mxu0 0.0
        %566 = vmatpush.msra.mxu0 0.0
        %567 = vmatpush.msra.mxu0 0.0
        %568 = vmatpush.msra.mxu0 0.0
        %569 = vmatpush.msra.mxu0 0.0
        %570 = vmatpush.msra.mxu0 0.0
        %571 = vmatpush.msra.mxu0 0.0
        %572 = vmatpush.msra.mxu0 0.0
        %573 = vmatpush.msra.mxu0 0.0
        %574 = vmatpush.msra.mxu0 0.0
        %575 = vmatpush.msra.mxu0 0.0
        %576 = vmatpush.msra.mxu0 0.0
        %577 = vmatpush.msra.mxu0 0.0
        %578 = vmatpush.msra.mxu0 %v433
        %579 = vmatmul.f32.gmra.mxu0 %v561
        %v580 = vpop.f32.mrf.mxu0
        %v581 = vadd.f32 0.0, %v580
        %582 = vdwg.mxu0
        %583 = vst.msk [vmem:[%s420] sm:$0xff] %vm488, %v535
        %584 = vst.msk [vmem:[%s420 + $0x8] sm:$0xff] %vm488, %v536
        %585 = vst.msk [vmem:[%s413] sm:$0xff] %vm435, %v558
        %586 = vst.msk [vmem:[%s413 + $0x8] sm:$0xff] %vm435, %v581
        %s587 = sand.u32 %s177, 1
        %s588 = scalar_lea.sflag [#allocation4], %s587
        %s589 = sand.u32 %s177, 1
        %s590 = smul.addr %s589, 16
        %s591 = scalar_lea.vmem [#allocation10], %s590
        %s592 = sand.u32 %s207, 1
        %s593 = scalar_lea.sflag [#allocation12], %s592
        %s594 = sand.u32 %s207, 1
        %s595 = smul.addr %s594, 16
        %s596 = scalar_lea.vmem [#allocation11], %s595
        // Predicated region
        $region53: #{tpu_custom_call.1} parent=35 // pred_check
          %p597 = pneg %p187
        $region54: #{tpu_custom_call.1} parent=35 // pred_check_branch
          %599 = sbr.rel (%p597) target = $region56
        $region55: #{tpu_custom_call.1} parent=35 // pred_region
          %s600 = smul.u32 2, %s38
          %602 = vsyncadd %s588, 0
          %s603 = sadd.s32 %s39, %s600
          %s604 = smul.addr %s37, 2
          %s605 = sadd.s32 %s603, %s604
          %s606 = smul.addr %s605, 8
          %s607 = scalar_lea.hbm %s4, %s606
          %s608 = sshll.u32 %s591, 4
          %s609 = int_to_ptr.vmem [resolvable:$true] %s608
          %s610 = sshll.u32 %s607, 4
          %s611 = int_to_ptr.hbm [resolvable:$true] %s610
          %616 = dma.vmem_to_hbm [thread:$0]  %s609, 256, %s611, %s588, 128, 128, 8
        $region56: #{tpu_custom_call.1} parent=35 // pred_fallthru
          _
        // Predicated region
        $region57: #{tpu_custom_call.1} parent=35 // pred_check
          %p617 = pneg %p217
        $region58: #{tpu_custom_call.1} parent=35 // pred_check_branch
          %619 = sbr.rel (%p617) target = $region60
        $region59: #{tpu_custom_call.1} parent=35 // pred_region
          %s620 = smul.u32 2, %s38
          %622 = vsyncadd %s593, 0
          %s623 = sadd.s32 %s39, %s620
          %s624 = smul.addr %s37, 2
          %s625 = sadd.s32 %s623, %s624
          %s626 = smul.addr %s625, 8
          %s627 = scalar_lea.hbm %s5, %s626
          %s628 = sshll.u32 %s596, 4
          %s629 = int_to_ptr.vmem [resolvable:$true] %s628
          %s630 = sshll.u32 %s627, 4
          %s631 = int_to_ptr.hbm [resolvable:$true] %s630
          %636 = dma.vmem_to_hbm [thread:$0]  %s629, 256, %s631, %s593, 128, 128, 8
        $region60: #{tpu_custom_call.1} parent=35 // pred_fallthru
          _
      $region36: #{tpu_custom_call.1} parent=5 // pred_fallthru
        _
      %p637 = scmp.le.s32.totalorder 2, %s27
      // Predicated region
      $region61: #{tpu_custom_call.1} parent=5 // pred_check
        %p638 = pneg %p637
      $region62: #{tpu_custom_call.1} parent=5 // pred_check_branch
        %640 = sbr.rel (%p638) target = $region64
      $region63: #{tpu_custom_call.1} parent=5 // pred_region
        %s641 = ssub.s32 %s27, 2
        // Predicated region
        $region65: #{tpu_custom_call.1} parent=63 // pred_check
          %p642 = pneg %p193
        $region66: #{tpu_custom_call.1} parent=63 // pred_check_branch
          %644 = sbr.rel (%p642) target = $region68
        $region67: #{tpu_custom_call.1} parent=63 // pred_region
          %s645 = sand.u32 %s178, 1
          %s646 = scalar_lea.sflag [#allocation4], %s645
          %s647 = sand.u32 %s178, 1
          %s648 = smul.addr %s647, 16
          %s649 = scalar_lea.vmem [#allocation10], %s648
          %651 = dma.done %s646, 256
        $region68: #{tpu_custom_call.1} parent=63 // pred_fallthru
          _
        // Predicated region
        $region69: #{tpu_custom_call.1} parent=63 // pred_check
          %p652 = pneg %p223
        $region70: #{tpu_custom_call.1} parent=63 // pred_check_branch
          %654 = sbr.rel (%p652) target = $region72
        $region71: #{tpu_custom_call.1} parent=63 // pred_region
          %s655 = sand.u32 %s208, 1
          %s656 = scalar_lea.sflag [#allocation12], %s655
          %s657 = sand.u32 %s208, 1
          %s658 = smul.addr %s657, 16
          %s659 = scalar_lea.vmem [#allocation11], %s658
          %661 = dma.done %s656, 256
        $region72: #{tpu_custom_call.1} parent=63 // pred_fallthru
          _
      $region64: #{tpu_custom_call.1} parent=5 // pred_fallthru
        _
    $region6: #{tpu_custom_call.1} parent=1 // loop_footer
      %s31 = sadd.s32 1, %s27
    $region7: #{tpu_custom_call.1} parent=1 // loop_footer_branch
      %26 = sbr.rel target = $region3
    $region8: #{tpu_custom_call.1} parent=1 // loop_exit
      _
    %662 = vsyncpa [#allocation3], 1
    %s663 = scalar_lea.sflag [#allocation3], 1
    %664 = vsyncpa %s663, 1
    %665 = vsyncpa [#allocation6], 1
    %s666 = scalar_lea.sflag [#allocation6], 1
    %667 = vsyncpa %s666, 1
    %668 = vsyncpa [#allocation9], 1
    %s669 = scalar_lea.sflag [#allocation9], 1
    %670 = vsyncpa %s669, 1
    %671 = vsyncpa [#allocation4], 1
    %s672 = scalar_lea.sflag [#allocation4], 1
    %673 = vsyncpa %s672, 1
    %674 = vsyncpa [#allocation12], 1
    %s675 = scalar_lea.sflag [#allocation12], 1
    %676 = vsyncpa %s675, 1

</llo_original>
